<compile_context>
chip_gen: v6e
topology: v6e:2x2x1
jax: 0.10.0
libtpu: 0.0.40
codegen_flags: <defaults>
</compile_context>

<pallas_src>
import math

import jax
import jax.numpy as jnp
from jax.experimental import pallas as pl
from jax.experimental.pallas import tpu as pltpu

MATMUL_DTYPE = jnp.bfloat16  # MXU inputs; accumulation stays f32 in-kernel.


# ---------------------------------------------------------------------------
# Kernels
# ---------------------------------------------------------------------------
def _cde_mlp_kernel(z_ref, w1_ref, b1_ref, w2_ref, b2_ref, out_ref):
    """CDEFunc MLP only: (TILE_M, hid) -> (TILE_M, x_in*hid) flat tanh output.

    z_ref  : (TILE_M, hid)       bf16  (row-tiled over the grid)
    w1_ref : (hid, 128)          bf16  (whole array, VMEM-resident)
    b1_ref : (1, 128)            f32
    w2_ref : (128, x_in*hid)     bf16  (whole array, VMEM-resident)
    b2_ref : (1, x_in*hid)       f32
    out_ref: (TILE_M, x_in*hid)  f32   (lane-dense, torch column order j=h*x_in+x)
    """
    h = jnp.dot(z_ref[...], w1_ref[...], preferred_element_type=jnp.float32) + b1_ref[...]
    h = jnp.maximum(h, 0.0)                                              # relu (f32, VPU)
    o = jnp.dot(h.astype(w2_ref.dtype), w2_ref[...],
                preferred_element_type=jnp.float32) + b2_ref[...]
    out_ref[...] = jnp.tanh(o).astype(out_ref.dtype)                     # tanh (EUP)


def _cde_vector_field_kernel(z_ref, dxdt_ref, w1_ref, b1_ref, w2_ref, b2_ref,
                             expand_ref, reduce_ref, out_ref):
    """Fused VectorField: CDEFunc MLP + dX/dt contraction, per row.

    out[m, h] = sum_x tanh(o)[m, h*x_in + x] * dxdt[m, x]

    Extra operands (constant, built once in prepare_cde_weights):
      expand_ref : (x_in, x_in*hid)  f32, expand[x, j] = [j %  x_in == x]
      reduce_ref : (x_in*hid, hid)   f32, reduce[j, h] = [j // x_in == h]
    so the contraction is two small MXU matmuls (MXU has huge slack here),
    and the stored output is only (TILE_M, hid).
    """
    h = jnp.dot(z_ref[...], w1_ref[...], preferred_element_type=jnp.float32) + b1_ref[...]
    h = jnp.maximum(h, 0.0)
    o = jnp.dot(h.astype(w2_ref.dtype), w2_ref[...],
                preferred_element_type=jnp.float32) + b2_ref[...]
    t = jnp.tanh(o)                                                      # (TILE_M, x_in*hid)
    # dx expanded to every (h, x) column:  dx_e[m, j] = dxdt[m, j % x_in]
    dx_e = jnp.dot(dxdt_ref[...], expand_ref[...],
                   preferred_element_type=jnp.float32)                   # (TILE_M, x_in*hid)
    # group-sum the x_in columns belonging to each hidden unit
    out_ref[...] = jnp.dot(t * dx_e, reduce_ref[...],
                           preferred_element_type=jnp.float32).astype(out_ref.dtype)


# ---------------------------------------------------------------------------
# One-time parameter preparation (outside any solver loop)
# ---------------------------------------------------------------------------
def prepare_cde_weights(w1, b1, w2, b2, x_input_size, h_hidden_size,
                        matmul_dtype=MATMUL_DTYPE):
    """Transpose torch-layout (out, in) weights to (in, out), cast matmul
    operands to bf16, and build the constant dX/dt-contraction matrices."""
    w1_t = jnp.asarray(w1, jnp.float32).T.astype(matmul_dtype)           # (hid, 128)
    w2_t = jnp.asarray(w2, jnp.float32).T.astype(matmul_dtype)           # (128, x_in*hid)
    b1_2d = jnp.asarray(b1, jnp.float32).reshape(1, -1)                  # (1, 128)
    b2_2d = jnp.asarray(b2, jnp.float32).reshape(1, -1)                  # (1, x_in*hid)
    # torch .view(..., hid, x_in): flat column j corresponds to (h, x) = (j // x_in, j % x_in)
    j = jnp.arange(x_input_size * h_hidden_size)
    expand = (j[None, :] % x_input_size
              == jnp.arange(x_input_size)[:, None]).astype(jnp.float32)  # (x_in, x_in*hid)
    reduce_ = (j[:, None] // x_input_size
               == jnp.arange(h_hidden_size)[None, :]).astype(jnp.float32)  # (x_in*hid, hid)
    return (w1_t, b1_2d, w2_t, b2_2d, expand, reduce_)


# ---------------------------------------------------------------------------
# Row tiling
# ---------------------------------------------------------------------------
def _row_tiling(R, tile_m):
    """Pick (tile, n_tiles, padded_R).  Prefers: single whole-array tile when
    R <= tile_m, otherwise a tile that divides R (no jnp.pad HBM copy)."""
    if R <= tile_m:
        return R, 1, R
    if R % tile_m == 0:
        return tile_m, R // tile_m, R
    t = tile_m - (tile_m % 8)
    while t >= 8:
        if R % t == 0:
            return t, R // t, R
        t -= 8
    # Last-resort fallback: pad (extra HBM copy; callers should pick divisible R).
    n = pl.cdiv(R, tile_m)
    return tile_m, n, n * tile_m


_VMEM_SPEC = pl.BlockSpec(memory_space=pltpu.MemorySpace.VMEM)  # whole-array, grid-resident


# ---------------------------------------------------------------------------
# Wrappers
# ---------------------------------------------------------------------------
def cde_func_rows(z_rows, params, *, tile_m=512):
    """CDEFunc MLP on R independent z rows: (R, hid) f32 -> (R, x_in*hid) f32 (flat)."""
    w1_t, b1, w2_t, b2, _, _ = params
    R, hid = z_rows.shape
    out_dim = w2_t.shape[1]
    tile, n_tiles, r_pad = _row_tiling(R, tile_m)

    z = z_rows.astype(w1_t.dtype)                  # bf16 MXU input, halves z DMA bytes
    if r_pad != R:
        z = jnp.pad(z, ((0, r_pad - R), (0, 0)))   # fallback only

    out_flat = pl.pallas_call(
        _cde_mlp_kernel,
        out_shape=jax.ShapeDtypeStruct((r_pad, out_dim), jnp.float32),
        grid=(n_tiles,),
        in_specs=[
            pl.BlockSpec((tile, hid), lambda i: (i, 0)),   # z rows (pipelined)
            _VMEM_SPEC, _VMEM_SPEC, _VMEM_SPEC, _VMEM_SPEC,
        ],
        out_specs=pl.BlockSpec((tile, out_dim), lambda i: (i, 0)),
        compiler_params=pltpu.CompilerParams(
            dimension_semantics=("parallel",)),            # rows independent (v7x 2 TCs)
    )(z, w1_t, b1, w2_t, b2)
    return out_flat[:R]


def cde_vector_field_rows(z_rows, dxdt_rows, params, *, tile_m=512):
    """Fused VectorField evaluation on R rows.

    z_rows    : (R, hid)  f32   solver state, row-major (no transposes needed)
    dxdt_rows : (R, x_in) f32   control derivative per row
    returns   : (R, hid)  f32   dz/dt  (= CDEFunc(z) @ dX/dt per row)
    """
    w1_t, b1, w2_t, b2, expand, reduce_ = params
    R, hid = z_rows.shape
    x_in = dxdt_rows.shape[1]
    tile, n_tiles, r_pad = _row_tiling(R, tile_m)

    z = z_rows.astype(w1_t.dtype)
    dx = dxdt_rows.astype(jnp.float32)
    if r_pad != R:
        z = jnp.pad(z, ((0, r_pad - R), (0, 0)))
        dx = jnp.pad(dx, ((0, r_pad - R), (0, 0)))

    out = pl.pallas_call(
        _cde_vector_field_kernel,
        out_shape=jax.ShapeDtypeStruct((r_pad, hid), jnp.float32),
        grid=(n_tiles,),
        in_specs=[
            pl.BlockSpec((tile, hid), lambda i: (i, 0)),    # z rows
            pl.BlockSpec((tile, x_in), lambda i: (i, 0)),   # dX/dt rows
            _VMEM_SPEC, _VMEM_SPEC, _VMEM_SPEC, _VMEM_SPEC,  # w1, b1, w2, b2
            _VMEM_SPEC, _VMEM_SPEC,                          # expand, reduce
        ],
        out_specs=pl.BlockSpec((tile, hid), lambda i: (i, 0)),
        compiler_params=pltpu.CompilerParams(
            dimension_semantics=("parallel",)),
    )(z, dx, w1_t, b1, w2_t, b2, expand, reduce_)
    return out[:R]


def _init_linear(key, in_features, out_features):
    """Deterministic init mimicking torch.nn.Linear default (uniform +-1/sqrt(fan_in))."""
    kw, kb = jax.random.split(key)
    bound = 1.0 / math.sqrt(in_features)
    w = jax.random.uniform(kw, (out_features, in_features), jnp.float32, -bound, bound)
    b = jax.random.uniform(kb, (out_features,), jnp.float32, -bound, bound)
    return w, b


# ---------------------------------------------------------------------------
# Demo / self-check
# ---------------------------------------------------------------------------
if __name__ == "__main__":
    x_input_size = 4        # CDE "input_size" (img_output_size)
    h_hidden_size = 32      # hidden state size
    n_blocks = 8            # rows per evaluation
    n_evals = 128           # batched solver evaluations -> R = 1024 rows = 2 x 512 tiles
    R = n_evals * n_blocks  # divisible by tile_m=512 -> no padding copy

    key = jax.random.PRNGKey(0)
    k_z, k_dx, k_l1, k_l2 = jax.random.split(key, 4)

    # Shared CDEFunc weights, torch layout (out_features, in_features).
    w1, b1 = _init_linear(k_l1, h_hidden_size, 128)                      # linear1
    w2, b2 = _init_linear(k_l2, 128, x_input_size * h_hidden_size)       # linear2
    params = prepare_cde_weights(w1, b1, w2, b2, x_input_size, h_hidden_size)

    # Solver state carried directly as (rows, hid) -> no per-evaluation transposes.
    z_rows = jax.random.normal(k_z, (R, h_hidden_size), jnp.float32)
    dxdt_rows = jax.random.normal(k_dx, (R, x_input_size), jnp.float32)

    # Fused VectorField (the path the ODE solver actually needs): (R, hid).
    fused = jax.jit(lambda z, dx: cde_vector_field_rows(z, dx, params))
    out_vf = jax.block_until_ready(fused(z_rows, dxdt_rows))
    assert out_vf.shape == (R, h_hidden_size)

    # Plain CDEFunc output (original module semantics, flat then viewed).
    flat = jax.jit(lambda z: cde_func_rows(z, params))
    out_flat = jax.block_until_ready(flat(z_rows))
    vf_view = out_flat.reshape(R, h_hidden_size, x_input_size)           # CDEFunc.forward view
    assert vf_view.shape == (R, h_hidden_size, x_input_size)

    # ---- Reference checks (plain JAX, outside Pallas) ----
    w1_bf, w2_bf = w1.T.astype(MATMUL_DTYPE), w2.T.astype(MATMUL_DTYPE)
    z_bf = z_rows.astype(MATMUL_DTYPE)

    # (a) Same-precision MLP reference (bf16 MXU inputs, f32 accumulation): tight.
    h_ref = jnp.maximum(
        jnp.dot(z_bf, w1_bf, preferred_element_type=jnp.float32) + b1, 0.0)
    o_ref = jnp.tanh(
        jnp.dot(h_ref.astype(MATMUL_DTYPE), w2_bf, preferred_element_type=jnp.float32) + b2)
    assert jnp.allclose(out_flat, o_ref, atol=1e-3, rtol=1e-3)

    # (b) Fused output vs same-precision MLP + exact f32 contraction (VectorField).
    vf_ref = o_ref.reshape(R, h_hidden_size, x_input_size)
    out_vf_ref = jnp.sum(vf_ref * dxdt_rows[:, None, :], axis=-1)
    assert jnp.allclose(out_vf, out_vf_ref, atol=5e-2, rtol=0)

    # (c) Fused output vs contraction of the kernel's own flat output
    #     (isolates the in-kernel contraction structure).
    out_vf_from_flat = jnp.sum(vf_view * dxdt_rows[:, None, :], axis=-1)
    assert jnp.allclose(out_vf, out_vf_from_flat, atol=5e-2, rtol=0)

    # (d) Full-f32 reference: loose sanity bound (bf16 MXU inputs -> ~1e-2 abs).
    ref_f32 = jnp.tanh(jnp.maximum(z_rows @ w1.T + b1, 0.0) @ w2.T + b2)
    assert jnp.allclose(out_flat, ref_f32, atol=5e-2, rtol=0)

    print("KERNEL_OK")
</pallas_src>

<mosaic_0001>
module attributes {stable_mosaic.version = 11 : i64} {
  func.func @_cde_vector_field_kernel(%arg0: i32, %arg1: memref<512x32xbf16, #tpu.memory_space<vmem>>, %arg2: memref<512x4xf32, #tpu.memory_space<vmem>>, %arg3: memref<32x128xbf16, #tpu.memory_space<vmem>>, %arg4: memref<1x128xf32, #tpu.memory_space<vmem>>, %arg5: memref<128x128xbf16, #tpu.memory_space<vmem>>, %arg6: memref<1x128xf32, #tpu.memory_space<vmem>>, %arg7: memref<4x128xf32, #tpu.memory_space<vmem>>, %arg8: memref<128x32xf32, #tpu.memory_space<vmem>>, %arg9: memref<512x32xf32, #tpu.memory_space<vmem>>) attributes {dimension_semantics = [#tpu.dimension_semantics<parallel>], iteration_bounds = array<i64: 2>, scalar_prefetch = 0 : i64, scratch_operands = 0 : i64, tpu.core_type = #tpu.core_type<tc>, window_params = [{transform_indices = @transform_0, window_bounds = array<i64: 512, 32>}, {transform_indices = @transform_1, window_bounds = array<i64: 512, 4>}, {pipeline_mode = #tpu.pipeline_mode<synchronous>, transform_indices = @transform_2, window_bounds = array<i64: 32, 128>}, {pipeline_mode = #tpu.pipeline_mode<synchronous>, transform_indices = @transform_3, window_bounds = array<i64: 1, 128>}, {pipeline_mode = #tpu.pipeline_mode<synchronous>, transform_indices = @transform_4, window_bounds = array<i64: 128, 128>}, {pipeline_mode = #tpu.pipeline_mode<synchronous>, transform_indices = @transform_5, window_bounds = array<i64: 1, 128>}, {pipeline_mode = #tpu.pipeline_mode<synchronous>, transform_indices = @transform_6, window_bounds = array<i64: 4, 128>}, {pipeline_mode = #tpu.pipeline_mode<synchronous>, transform_indices = @transform_7, window_bounds = array<i64: 128, 32>}, {transform_indices = @transform_8, window_bounds = array<i64: 512, 32>}]} {
    %c0 = arith.constant 0 : index
    %c0_0 = arith.constant 0 : index
    %0 = vector.load %arg1[%c0, %c0_0] : memref<512x32xbf16, #tpu.memory_space<vmem>>, vector<512x32xbf16>
    %c0_1 = arith.constant 0 : index
    %c0_2 = arith.constant 0 : index
    %1 = vector.load %arg3[%c0_1, %c0_2] : memref<32x128xbf16, #tpu.memory_space<vmem>>, vector<32x128xbf16>
    %cst = arith.constant dense<0.000000e+00> : vector<512x128xf32>
    %2 = tpu.matmul %0, %1, %cst {dimension_numbers = #tpu.dot_dimension_numbers<[1], [0], [0], [1], [0, 0, 1, 1], [], []>} : vector<512x32xbf16>, vector<32x128xbf16>, vector<512x128xf32> -> vector<512x128xf32>
    %c0_3 = arith.constant 0 : index
    %c0_4 = arith.constant 0 : index
    %3 = vector.load %arg4[%c0_3, %c0_4] : memref<1x128xf32, #tpu.memory_space<vmem>>, vector<1x128xf32>
    %4 = vector.broadcast %3 : vector<1x128xf32> to vector<512x128xf32>
    %5 = arith.addf %2, %4 : vector<512x128xf32>
    %cst_5 = arith.constant 0.000000e+00 : f32
    %6 = vector.broadcast %cst_5 : f32 to vector<512x128xf32>
    %7 = arith.maximumf %5, %6 : vector<512x128xf32>
    %8 = arith.truncf %7 : vector<512x128xf32> to vector<512x128xbf16>
    %c0_6 = arith.constant 0 : index
    %c0_7 = arith.constant 0 : index
    %9 = vector.load %arg5[%c0_6, %c0_7] : memref<128x128xbf16, #tpu.memory_space<vmem>>, vector<128x128xbf16>
    %cst_8 = arith.constant dense<0.000000e+00> : vector<512x128xf32>
    %10 = tpu.matmul %8, %9, %cst_8 {dimension_numbers = #tpu.dot_dimension_numbers<[1], [0], [0], [1], [0, 0, 1, 1], [], []>} : vector<512x128xbf16>, vector<128x128xbf16>, vector<512x128xf32> -> vector<512x128xf32>
    %c0_9 = arith.constant 0 : index
    %c0_10 = arith.constant 0 : index
    %11 = vector.load %arg6[%c0_9, %c0_10] : memref<1x128xf32, #tpu.memory_space<vmem>>, vector<1x128xf32>
    %12 = vector.broadcast %11 : vector<1x128xf32> to vector<512x128xf32>
    %13 = arith.addf %10, %12 : vector<512x128xf32>
    %14 = math.tanh %13 : vector<512x128xf32>
    %c0_11 = arith.constant 0 : index
    %c0_12 = arith.constant 0 : index
    %15 = vector.load %arg2[%c0_11, %c0_12] : memref<512x4xf32, #tpu.memory_space<vmem>>, vector<512x4xf32>
    %c0_13 = arith.constant 0 : index
    %c0_14 = arith.constant 0 : index
    %16 = vector.load %arg7[%c0_13, %c0_14] : memref<4x128xf32, #tpu.memory_space<vmem>>, vector<4x128xf32>
    %cst_15 = arith.constant dense<0.000000e+00> : vector<512x128xf32>
    %17 = tpu.matmul %15, %16, %cst_15 {dimension_numbers = #tpu.dot_dimension_numbers<[1], [0], [0], [1], [0, 0, 1, 1], [], []>} : vector<512x4xf32>, vector<4x128xf32>, vector<512x128xf32> -> vector<512x128xf32>
    %18 = arith.mulf %14, %17 : vector<512x128xf32>
    %c0_16 = arith.constant 0 : index
    %c0_17 = arith.constant 0 : index
    %19 = vector.load %arg8[%c0_16, %c0_17] : memref<128x32xf32, #tpu.memory_space<vmem>>, vector<128x32xf32>
    %cst_18 = arith.constant dense<0.000000e+00> : vector<512x32xf32>
    %20 = tpu.matmul %18, %19, %cst_18 {dimension_numbers = #tpu.dot_dimension_numbers<[1], [0], [0], [1], [0, 0, 1, 1], [], []>} : vector<512x128xf32>, vector<128x32xf32>, vector<512x32xf32> -> vector<512x32xf32>
    %c0_19 = arith.constant 0 : index
    %c0_20 = arith.constant 0 : index
    %21 = vector.load %arg9[%c0_19, %c0_20] : memref<512x32xf32, #tpu.memory_space<vmem>>, vector<512x32xf32>
    tpu.vector_store %arg9[%c0_19, %c0_20], %20 {strides = array<i32>} : memref<512x32xf32, #tpu.memory_space<vmem>>, vector<512x32xf32>,
    return
  }
  func.func @transform_0(%arg0: i32) -> (i32, i32) {
    %c0_i32 = arith.constant 0 : i32
    %c0_i32_0 = arith.constant 0 : i32
    return %arg0, %c0_i32 : i32, i32
  }
  func.func @transform_1(%arg0: i32) -> (i32, i32) {
    %c0_i32 = arith.constant 0 : i32
    %c0_i32_0 = arith.constant 0 : i32
    return %arg0, %c0_i32 : i32, i32
  }
  func.func @transform_2(%arg0: i32) -> (i32, i32) {
    %c0_i32 = arith.constant 0 : i32
    %c0_i32_0 = arith.constant 0 : i32
    %c0_i32_1 = arith.constant 0 : i32
    return %c0_i32, %c0_i32_0 : i32, i32
  }
  func.func @transform_3(%arg0: i32) -> (i32, i32) {
    %c0_i32 = arith.constant 0 : i32
    %c0_i32_0 = arith.constant 0 : i32
    %c0_i32_1 = arith.constant 0 : i32
    return %c0_i32, %c0_i32_0 : i32, i32
  }
  func.func @transform_4(%arg0: i32) -> (i32, i32) {
    %c0_i32 = arith.constant 0 : i32
    %c0_i32_0 = arith.constant 0 : i32
    %c0_i32_1 = arith.constant 0 : i32
    return %c0_i32, %c0_i32_0 : i32, i32
  }
  func.func @transform_5(%arg0: i32) -> (i32, i32) {
    %c0_i32 = arith.constant 0 : i32
    %c0_i32_0 = arith.constant 0 : i32
    %c0_i32_1 = arith.constant 0 : i32
    return %c0_i32, %c0_i32_0 : i32, i32
  }
  func.func @transform_6(%arg0: i32) -> (i32, i32) {
    %c0_i32 = arith.constant 0 : i32
    %c0_i32_0 = arith.constant 0 : i32
    %c0_i32_1 = arith.constant 0 : i32
    return %c0_i32, %c0_i32_0 : i32, i32
  }
  func.func @transform_7(%arg0: i32) -> (i32, i32) {
    %c0_i32 = arith.constant 0 : i32
    %c0_i32_0 = arith.constant 0 : i32
    %c0_i32_1 = arith.constant 0 : i32
    return %c0_i32, %c0_i32_0 : i32, i32
  }
  func.func @transform_8(%arg0: i32) -> (i32, i32) {
    %c0_i32 = arith.constant 0 : i32
    %c0_i32_0 = arith.constant 0 : i32
    return %arg0, %c0_i32 : i32, i32
  }
}

</mosaic_0001>

<llo_original>
// kernel: _lambda_.1
$region0: #{_lambda_.1}
  #allocation0 [shape = 'u32[]', space=smem, size = 0x4, offset = 0x4, fixed_abs, tag = 'smem constant byte address 0x4 - core index']
  #allocation1 [shape = 'u32[144,128]{1,0:T(1,128)}', space=vmem, size = 0x12000, scoped, tag = 'internal scratch']
  %s0 = inlined_call_operand.vmem [shape: bf16[1024,32], index: 0, kind: input, shape index: {}]
  %s1 = inlined_call_operand.vmem [shape: f32[1024,4], index: 1, kind: input, shape index: {}]
  %s2 = inlined_call_operand.vmem [shape: bf16[32,128], index: 2, kind: input, shape index: {}]
  %s3 = inlined_call_operand.vmem [shape: f32[1,128], index: 3, kind: input, shape index: {}]
  %s4 = inlined_call_operand.vmem [shape: bf16[128,128], index: 4, kind: input, shape index: {}]
  %s5 = inlined_call_operand.vmem [shape: f32[1,128], index: 5, kind: input, shape index: {}]
  %s6 = inlined_call_operand.vmem [shape: f32[4,128], index: 6, kind: input, shape index: {}]
  %s7 = inlined_call_operand.vmem [shape: f32[128,32], index: 7, kind: input, shape index: {}]
  %s8 = inlined_call_operand.vmem [shape: f32[1024,32], index: 8, kind: output, shape index: {}]
  %s9 = sld [smem:[#allocation0]]
  $region65: #{_lambda_.1} parent=0
    _
  %s11 = ssub.s32 1, %s9
  %s12 = scalar_select 0, %s11, %s9
  loop: start=0, step=1, limit=4
  $region2: #{_lambda_.1} parent=0 // loop_pre_header
    _
  $region3: #{_lambda_.1} parent=0 // loop_header
    %s14 = sphi 0, %s18
    %p15 = scmp.ge.s32.totalorder %s14, 4
    %s24 = sphi 0, %s26
    %s27 = sphi 0, %s24
    %s28 = sphi 0, %s27
    %s44 = sphi 0, %s28
    %s50 = sphi 0, %s52
    %s53 = sphi 0, %s50
    %s54 = sphi 0, %s53
    %s70 = sphi 0, %s54
    %s74 = sphi 0, %s74
    %s76 = sphi 0, %s74
    %s77 = sphi 0, %s76
    %s91 = sphi 0, %s77
    %s95 = sphi 0, %s95
    %s97 = sphi 0, %s95
    %s98 = sphi 0, %s97
    %s112 = sphi 0, %s98
    %s116 = sphi 0, %s116
    %s118 = sphi 0, %s116
    %s119 = sphi 0, %s118
    %s133 = sphi 0, %s119
    %s137 = sphi 0, %s137
    %s139 = sphi 0, %s137
    %s140 = sphi 0, %s139
    %s154 = sphi 0, %s140
    %s158 = sphi 0, %s158
    %s160 = sphi 0, %s158
    %s161 = sphi 0, %s160
    %s175 = sphi 0, %s161
    %s179 = sphi 0, %s179
    %s181 = sphi 0, %s179
    %s182 = sphi 0, %s181
    %s196 = sphi 0, %s182
    %s202 = sphi 0, %s204
    %s205 = sphi 0, %s202
    %s206 = sphi 0, %s205
    %s222 = sphi 0, %s206
  $region4: #{_lambda_.1} parent=0 // loop_header_branch
    %17 = sbr.rel (%p15) target = $region8
  $region5: #{_lambda_.1} parent=0 // loop_body
    %s19 = ssub.s32 %s14, 1
    %s20 = ssub.s32 %s14, 2
    %s21 = sadd.s32 %s14, 1
    %s22 = ssub.s32 %s14, %s21
    %p23 = scmp.eq.s32.totalorder %s22, 0
    %s25 = sadd.s32 %s24, 1
    %s26 = scalar_select %p23, %s24, %s25
    %p29 = pneg %p23
    %p30 = scmp.eq.s32.totalorder %s14, 1
    %p31 = por %p29, %p30
    %p32 = scmp.ne.s32.totalorder %s24, %s27
    %p33 = scmp.eq.s32.totalorder %s14, 0
    %p34 = por %p32, %p33
    %p35 = scmp.ne.s32.totalorder %s24, %s27
    %p36 = scmp.eq.s32.totalorder %s19, 1
    %p37 = por %p35, %p36
    %p38 = scmp.ne.s32.totalorder %s27, %s28
    %p39 = scmp.eq.s32.totalorder %s19, 0
    %p40 = por %p38, %p39
    %p41 = scmp.ne.s32.totalorder %s27, %s28
    %p42 = scmp.eq.s32.totalorder %s20, 1
    %p43 = por %p41, %p42
    %p45 = scmp.ne.s32.totalorder %s28, %s44
    %p46 = scmp.eq.s32.totalorder %s20, 0
    %p47 = por %p45, %p46
    %s48 = ssub.s32 %s14, %s21
    %p49 = scmp.eq.s32.totalorder %s48, 0
    %s51 = sadd.s32 %s50, 1
    %s52 = scalar_select %p49, %s50, %s51
    %p55 = pneg %p49
    %p56 = scmp.eq.s32.totalorder %s14, 1
    %p57 = por %p55, %p56
    %p58 = scmp.ne.s32.totalorder %s50, %s53
    %p59 = scmp.eq.s32.totalorder %s14, 0
    %p60 = por %p58, %p59
    %p61 = scmp.ne.s32.totalorder %s50, %s53
    %p62 = scmp.eq.s32.totalorder %s19, 1
    %p63 = por %p61, %p62
    %p64 = scmp.ne.s32.totalorder %s53, %s54
    %p65 = scmp.eq.s32.totalorder %s19, 0
    %p66 = por %p64, %p65
    %p67 = scmp.ne.s32.totalorder %s53, %s54
    %p68 = scmp.eq.s32.totalorder %s20, 1
    %p69 = por %p67, %p68
    %p71 = scmp.ne.s32.totalorder %s54, %s70
    %p72 = scmp.eq.s32.totalorder %s20, 0
    %p73 = por %p71, %p72
    %s75 = sadd.s32 %s74, 1
    %p78 = scmp.eq.s32.totalorder %s14, 1
    %p79 = scmp.ne.s32.totalorder %s74, %s76
    %p80 = scmp.eq.s32.totalorder %s14, 0
    %p81 = por %p79, %p80
    %p82 = scmp.ne.s32.totalorder %s74, %s76
    %p83 = scmp.eq.s32.totalorder %s19, 1
    %p84 = por %p82, %p83
    %p85 = scmp.ne.s32.totalorder %s76, %s77
    %p86 = scmp.eq.s32.totalorder %s19, 0
    %p87 = por %p85, %p86
    %p88 = scmp.ne.s32.totalorder %s76, %s77
    %p89 = scmp.eq.s32.totalorder %s20, 1
    %p90 = por %p88, %p89
    %p92 = scmp.ne.s32.totalorder %s77, %s91
    %p93 = scmp.eq.s32.totalorder %s20, 0
    %p94 = por %p92, %p93
    %s96 = sadd.s32 %s95, 1
    %p99 = scmp.eq.s32.totalorder %s14, 1
    %p100 = scmp.ne.s32.totalorder %s95, %s97
    %p101 = scmp.eq.s32.totalorder %s14, 0
    %p102 = por %p100, %p101
    %p103 = scmp.ne.s32.totalorder %s95, %s97
    %p104 = scmp.eq.s32.totalorder %s19, 1
    %p105 = por %p103, %p104
    %p106 = scmp.ne.s32.totalorder %s97, %s98
    %p107 = scmp.eq.s32.totalorder %s19, 0
    %p108 = por %p106, %p107
    %p109 = scmp.ne.s32.totalorder %s97, %s98
    %p110 = scmp.eq.s32.totalorder %s20, 1
    %p111 = por %p109, %p110
    %p113 = scmp.ne.s32.totalorder %s98, %s112
    %p114 = scmp.eq.s32.totalorder %s20, 0
    %p115 = por %p113, %p114
    %s117 = sadd.s32 %s116, 1
    %p120 = scmp.eq.s32.totalorder %s14, 1
    %p121 = scmp.ne.s32.totalorder %s116, %s118
    %p122 = scmp.eq.s32.totalorder %s14, 0
    %p123 = por %p121, %p122
    %p124 = scmp.ne.s32.totalorder %s116, %s118
    %p125 = scmp.eq.s32.totalorder %s19, 1
    %p126 = por %p124, %p125
    %p127 = scmp.ne.s32.totalorder %s118, %s119
    %p128 = scmp.eq.s32.totalorder %s19, 0
    %p129 = por %p127, %p128
    %p130 = scmp.ne.s32.totalorder %s118, %s119
    %p131 = scmp.eq.s32.totalorder %s20, 1
    %p132 = por %p130, %p131
    %p134 = scmp.ne.s32.totalorder %s119, %s133
    %p135 = scmp.eq.s32.totalorder %s20, 0
    %p136 = por %p134, %p135
    %s138 = sadd.s32 %s137, 1
    %p141 = scmp.eq.s32.totalorder %s14, 1
    %p142 = scmp.ne.s32.totalorder %s137, %s139
    %p143 = scmp.eq.s32.totalorder %s14, 0
    %p144 = por %p142, %p143
    %p145 = scmp.ne.s32.totalorder %s137, %s139
    %p146 = scmp.eq.s32.totalorder %s19, 1
    %p147 = por %p145, %p146
    %p148 = scmp.ne.s32.totalorder %s139, %s140
    %p149 = scmp.eq.s32.totalorder %s19, 0
    %p150 = por %p148, %p149
    %p151 = scmp.ne.s32.totalorder %s139, %s140
    %p152 = scmp.eq.s32.totalorder %s20, 1
    %p153 = por %p151, %p152
    %p155 = scmp.ne.s32.totalorder %s140, %s154
    %p156 = scmp.eq.s32.totalorder %s20, 0
    %p157 = por %p155, %p156
    %s159 = sadd.s32 %s158, 1
    %p162 = scmp.eq.s32.totalorder %s14, 1
    %p163 = scmp.ne.s32.totalorder %s158, %s160
    %p164 = scmp.eq.s32.totalorder %s14, 0
    %p165 = por %p163, %p164
    %p166 = scmp.ne.s32.totalorder %s158, %s160
    %p167 = scmp.eq.s32.totalorder %s19, 1
    %p168 = por %p166, %p167
    %p169 = scmp.ne.s32.totalorder %s160, %s161
    %p170 = scmp.eq.s32.totalorder %s19, 0
    %p171 = por %p169, %p170
    %p172 = scmp.ne.s32.totalorder %s160, %s161
    %p173 = scmp.eq.s32.totalorder %s20, 1
    %p174 = por %p172, %p173
    %p176 = scmp.ne.s32.totalorder %s161, %s175
    %p177 = scmp.eq.s32.totalorder %s20, 0
    %p178 = por %p176, %p177
    %s180 = sadd.s32 %s179, 1
    %p183 = scmp.eq.s32.totalorder %s14, 1
    %p184 = scmp.ne.s32.totalorder %s179, %s181
    %p185 = scmp.eq.s32.totalorder %s14, 0
    %p186 = por %p184, %p185
    %p187 = scmp.ne.s32.totalorder %s179, %s181
    %p188 = scmp.eq.s32.totalorder %s19, 1
    %p189 = por %p187, %p188
    %p190 = scmp.ne.s32.totalorder %s181, %s182
    %p191 = scmp.eq.s32.totalorder %s19, 0
    %p192 = por %p190, %p191
    %p193 = scmp.ne.s32.totalorder %s181, %s182
    %p194 = scmp.eq.s32.totalorder %s20, 1
    %p195 = por %p193, %p194
    %p197 = scmp.ne.s32.totalorder %s182, %s196
    %p198 = scmp.eq.s32.totalorder %s20, 0
    %p199 = por %p197, %p198
    %s200 = ssub.s32 %s14, %s21
    %p201 = scmp.eq.s32.totalorder %s200, 0
    %s203 = sadd.s32 %s202, 1
    %s204 = scalar_select %p201, %s202, %s203
    %p207 = pneg %p201
    %p208 = scmp.eq.s32.totalorder %s14, 1
    %p209 = por %p207, %p208
    %p210 = scmp.ne.s32.totalorder %s202, %s205
    %p211 = scmp.eq.s32.totalorder %s14, 0
    %p212 = por %p210, %p211
    %p213 = scmp.ne.s32.totalorder %s202, %s205
    %p214 = scmp.eq.s32.totalorder %s19, 1
    %p215 = por %p213, %p214
    %p216 = scmp.ne.s32.totalorder %s205, %s206
    %p217 = scmp.eq.s32.totalorder %s19, 0
    %p218 = por %p216, %p217
    %p219 = scmp.ne.s32.totalorder %s205, %s206
    %p220 = scmp.eq.s32.totalorder %s20, 1
    %p221 = por %p219, %p220
    %p223 = scmp.ne.s32.totalorder %s206, %s222
    %p224 = scmp.eq.s32.totalorder %s20, 0
    %p225 = por %p223, %p224
    %p226 = scmp.le.s32.totalorder 1, %s14
    %p227 = scmp.lt.s32.totalorder %s14, 3
    %p228 = pnand %p226, %p227
    %p229 = pneg %p228
    // Predicated region
    $region9: #{_lambda_.1} parent=5 // pred_check
      _
    $region10: #{_lambda_.1} parent=5 // pred_check_branch
      %231 = sbr.rel (%p228) target = $region12
    $region11: #{_lambda_.1} parent=5 // pred_region
      %s232 = ssub.s32 %s14, 1
      // Predicated region
      $region13: #{_lambda_.1} parent=11 // pred_check
        %p233 = pneg %p87
      $region14: #{_lambda_.1} parent=11 // pred_check_branch
        %235 = sbr.rel (%p233) target = $region16
      $region15: #{_lambda_.1} parent=11 // pred_region
        _
      $region16: #{_lambda_.1} parent=11 // pred_fallthru
        _
      // Predicated region
      $region17: #{_lambda_.1} parent=11 // pred_check
        %p236 = pneg %p108
      $region18: #{_lambda_.1} parent=11 // pred_check_branch
        %238 = sbr.rel (%p236) target = $region20
      $region19: #{_lambda_.1} parent=11 // pred_region
        _
      $region20: #{_lambda_.1} parent=11 // pred_fallthru
        _
      // Predicated region
      $region21: #{_lambda_.1} parent=11 // pred_check
        %p239 = pneg %p129
      $region22: #{_lambda_.1} parent=11 // pred_check_branch
        %241 = sbr.rel (%p239) target = $region24
      $region23: #{_lambda_.1} parent=11 // pred_region
        _
      $region24: #{_lambda_.1} parent=11 // pred_fallthru
        _
      // Predicated region
      $region25: #{_lambda_.1} parent=11 // pred_check
        %p242 = pneg %p150
      $region26: #{_lambda_.1} parent=11 // pred_check_branch
        %244 = sbr.rel (%p242) target = $region28
      $region27: #{_lambda_.1} parent=11 // pred_region
        _
      $region28: #{_lambda_.1} parent=11 // pred_fallthru
        _
      // Predicated region
      $region29: #{_lambda_.1} parent=11 // pred_check
        %p245 = pneg %p171
      $region30: #{_lambda_.1} parent=11 // pred_check_branch
        %247 = sbr.rel (%p245) target = $region32
      $region31: #{_lambda_.1} parent=11 // pred_region
        _
      $region32: #{_lambda_.1} parent=11 // pred_fallthru
        _
      // Predicated region
      $region33: #{_lambda_.1} parent=11 // pred_check
        %p248 = pneg %p192
      $region34: #{_lambda_.1} parent=11 // pred_check_branch
        %250 = sbr.rel (%p248) target = $region36
      $region35: #{_lambda_.1} parent=11 // pred_region
        _
      $region36: #{_lambda_.1} parent=11 // pred_fallthru
        _
    $region12: #{_lambda_.1} parent=5 // pred_fallthru
      _
    %p251 = scmp.lt.s32.totalorder %s14, 2
    // Predicated region
    $region37: #{_lambda_.1} parent=5 // pred_check
      %p252 = pneg %p251
    $region38: #{_lambda_.1} parent=5 // pred_check_branch
      %254 = sbr.rel (%p252) target = $region40
    $region39: #{_lambda_.1} parent=5 // pred_region
      // Predicated region
      $region41: #{_lambda_.1} parent=39 // pred_check
        %p255 = pneg %p34
      $region42: #{_lambda_.1} parent=39 // pred_check_branch
        %257 = sbr.rel (%p255) target = $region44
      $region43: #{_lambda_.1} parent=39 // pred_region
        %s258 = smul.u32 64, %s14
        %p259 = scmp.lt.s32.totalorder %s258, 127
        %s260 = scalar_select %p259, %s258, 127
        %s261 = smul.addr %s260, 4
        %s262 = scalar_lea.vmem %s0, %s261
        %s263 = smul.u32 64, %s14
      $region44: #{_lambda_.1} parent=39 // pred_fallthru
        _
      // Predicated region
      $region45: #{_lambda_.1} parent=39 // pred_check
        %p264 = pneg %p60
      $region46: #{_lambda_.1} parent=39 // pred_check_branch
        %266 = sbr.rel (%p264) target = $region48
      $region47: #{_lambda_.1} parent=39 // pred_region
        %s267 = smul.u32 64, %s14
        %p268 = scmp.lt.s32.totalorder %s267, 127
        %s269 = scalar_select %p268, %s267, 127
        %s270 = smul.addr %s269, 8
        %s271 = scalar_lea.vmem %s1, %s270
        %s272 = smul.u32 64, %s14
      $region48: #{_lambda_.1} parent=39 // pred_fallthru
        _
    $region40: #{_lambda_.1} parent=5 // pred_fallthru
      _
    %p273 = scmp.le.s32.totalorder 1, %s14
    %p274 = scmp.lt.s32.totalorder %s14, 3
    %p275 = pnand %p273, %p274
    %p276 = pneg %p275
    // Predicated region
    $region49: #{_lambda_.1} parent=5 // pred_check
      _
    $region50: #{_lambda_.1} parent=5 // pred_check_branch
      %278 = sbr.rel (%p275) target = $region52
    $region51: #{_lambda_.1} parent=5 // pred_region
      %s279 = ssub.s32 %s14, 1
      %s280 = smul.u32 64, %s19
      %p281 = scmp.lt.s32.totalorder %s280, 127
      %s282 = scalar_select %p281, %s280, 127
      %s283 = smul.addr %s282, 4
      %s284 = scalar_lea.vmem %s0, %s283
      %p285 = pneg %p40
      %p286 = pneg %p37
      %s287 = smul.u32 64, %s19
      %p288 = scmp.lt.s32.totalorder %s287, 127
      %s289 = scalar_select %p288, %s287, 127
      %s290 = smul.addr %s289, 8
      %s291 = scalar_lea.vmem %s1, %s290
      %p292 = pneg %p66
      %p293 = pneg %p63
      %p294 = pneg %p87
      %p295 = pneg %p84
      %p296 = pneg %p108
      %p297 = pneg %p105
      %p298 = pneg %p129
      %p299 = pneg %p126
      %p300 = pneg %p150
      %p301 = pneg %p147
      %p302 = pneg %p171
      %p303 = pneg %p168
      %p304 = pneg %p192
      %p305 = pneg %p189
      %p306 = pneg %p218
      %p307 = pneg %p215
      %s308 = smul.u32 64, %s19
      %p309 = scmp.lt.s32.totalorder %s308, 127
      %s310 = scalar_select %p309, %s308, 127
      %s311 = smul.addr %s310, 8
      %s312 = scalar_lea.vmem %s8, %s311
      %s313 = smul.u32 64, %s19
      %p314 = scmp.lt.s32.totalorder %s313, 127
      %s315 = scalar_select %p314, %s313, 127
      %s316 = smul.addr %s315, 4
      %s317 = scalar_lea.vmem %s0, %s316
      %s318 = smul.u32 64, %s19
      %s319 = smul.u32 64, %s19
      %p320 = scmp.lt.s32.totalorder %s319, 127
      %s321 = scalar_select %p320, %s319, 127
      %s322 = smul.addr %s321, 8
      %s323 = scalar_lea.vmem %s1, %s322
      %s324 = smul.u32 64, %s19
      %s325 = smul.u32 64, %s19
      %p326 = scmp.lt.s32.totalorder %s325, 127
      %s327 = scalar_select %p326, %s325, 127
      %s328 = smul.addr %s327, 8
      %s329 = scalar_lea.vmem %s8, %s328
      %s330 = smul.u32 64, %s19
      %v332 = vld [vmem:[%s317] sm:$0xf]
      %v333 = vld [vmem:[%s317 + $0x4] sm:$0xf]
      %v334 = vld [vmem:[%s317 + $0x8] sm:$0xf]
      %v335 = vld [vmem:[%s317 + $0xc] sm:$0xf]
      %v336 = vld [vmem:[%s317 + $0x10] sm:$0xf]
      %v337 = vld [vmem:[%s317 + $0x14] sm:$0xf]
      %v338 = vld [vmem:[%s317 + $0x18] sm:$0xf]
      %v339 = vld [vmem:[%s317 + $0x1c] sm:$0xf]
      %v340 = vld [vmem:[%s317 + $0x20] sm:$0xf]
      %v341 = vld [vmem:[%s317 + $0x24] sm:$0xf]
      %v342 = vld [vmem:[%s317 + $0x28] sm:$0xf]
      %v343 = vld [vmem:[%s317 + $0x2c] sm:$0xf]
      %v344 = vld [vmem:[%s317 + $0x30] sm:$0xf]
      %v345 = vld [vmem:[%s317 + $0x34] sm:$0xf]
      %v346 = vld [vmem:[%s317 + $0x38] sm:$0xf]
      %v347 = vld [vmem:[%s317 + $0x3c] sm:$0xf]
      %v348 = vld [vmem:[%s317 + $0x40] sm:$0xf]
      %v349 = vld [vmem:[%s317 + $0x44] sm:$0xf]
      %v350 = vld [vmem:[%s317 + $0x48] sm:$0xf]
      %v351 = vld [vmem:[%s317 + $0x4c] sm:$0xf]
      %v352 = vld [vmem:[%s317 + $0x50] sm:$0xf]
      %v353 = vld [vmem:[%s317 + $0x54] sm:$0xf]
      %v354 = vld [vmem:[%s317 + $0x58] sm:$0xf]
      %v355 = vld [vmem:[%s317 + $0x5c] sm:$0xf]
      %v356 = vld [vmem:[%s317 + $0x60] sm:$0xf]
      %v357 = vld [vmem:[%s317 + $0x64] sm:$0xf]
      %v358 = vld [vmem:[%s317 + $0x68] sm:$0xf]
      %v359 = vld [vmem:[%s317 + $0x6c] sm:$0xf]
      %v360 = vld [vmem:[%s317 + $0x70] sm:$0xf]
      %v361 = vld [vmem:[%s317 + $0x74] sm:$0xf]
      %v362 = vld [vmem:[%s317 + $0x78] sm:$0xf]
      %v363 = vld [vmem:[%s317 + $0x7c] sm:$0xf]
      %v364 = vld [vmem:[%s317 + $0x80] sm:$0xf]
      %v365 = vld [vmem:[%s317 + $0x84] sm:$0xf]
      %v366 = vld [vmem:[%s317 + $0x88] sm:$0xf]
      %v367 = vld [vmem:[%s317 + $0x8c] sm:$0xf]
      %v368 = vld [vmem:[%s317 + $0x90] sm:$0xf]
      %v369 = vld [vmem:[%s317 + $0x94] sm:$0xf]
      %v370 = vld [vmem:[%s317 + $0x98] sm:$0xf]
      %v371 = vld [vmem:[%s317 + $0x9c] sm:$0xf]
      %v372 = vld [vmem:[%s317 + $0xa0] sm:$0xf]
      %v373 = vld [vmem:[%s317 + $0xa4] sm:$0xf]
      %v374 = vld [vmem:[%s317 + $0xa8] sm:$0xf]
      %v375 = vld [vmem:[%s317 + $0xac] sm:$0xf]
      %v376 = vld [vmem:[%s317 + $0xb0] sm:$0xf]
      %v377 = vld [vmem:[%s317 + $0xb4] sm:$0xf]
      %v378 = vld [vmem:[%s317 + $0xb8] sm:$0xf]
      %v379 = vld [vmem:[%s317 + $0xbc] sm:$0xf]
      %v380 = vld [vmem:[%s317 + $0xc0] sm:$0xf]
      %v381 = vld [vmem:[%s317 + $0xc4] sm:$0xf]
      %v382 = vld [vmem:[%s317 + $0xc8] sm:$0xf]
      %v383 = vld [vmem:[%s317 + $0xcc] sm:$0xf]
      %v384 = vld [vmem:[%s317 + $0xd0] sm:$0xf]
      %v385 = vld [vmem:[%s317 + $0xd4] sm:$0xf]
      %v386 = vld [vmem:[%s317 + $0xd8] sm:$0xf]
      %v387 = vld [vmem:[%s317 + $0xdc] sm:$0xf]
      %v388 = vld [vmem:[%s317 + $0xe0] sm:$0xf]
      %v389 = vld [vmem:[%s317 + $0xe4] sm:$0xf]
      %v390 = vld [vmem:[%s317 + $0xe8] sm:$0xf]
      %v391 = vld [vmem:[%s317 + $0xec] sm:$0xf]
      %v392 = vld [vmem:[%s317 + $0xf0] sm:$0xf]
      %v393 = vld [vmem:[%s317 + $0xf4] sm:$0xf]
      %v394 = vld [vmem:[%s317 + $0xf8] sm:$0xf]
      %v395 = vld [vmem:[%s317 + $0xfc] sm:$0xf]
      %v396 = vld [vmem:[%s2] sm:$0xf]
      %v397 = vld [vmem:[%s2 + $0x4] sm:$0xf]
      %v398 = vld [vmem:[%s2 + $0x8] sm:$0xf]
      %v399 = vld [vmem:[%s2 + $0xc] sm:$0xf]
      %v400 = vld [vmem:[%s3] sm:$0x1]
      %v402 = vlaneseq
      %v403 = vshrl.u32 %v402, 7
      %v404 = vsub.s32 0, %v403
      %v405 = vrot.slane %v400, %v404
      %v471 = vunpack.c.l.b16 %v332
      %v472 = vunpack.c.l.b16 %v333
      %v473 = vunpack.c.l.b16 %v334
      %v474 = vunpack.c.l.b16 %v335
      %v475 = vunpack.c.l.b16 %v336
      %v476 = vunpack.c.l.b16 %v337
      %v477 = vunpack.c.l.b16 %v338
      %v478 = vunpack.c.l.b16 %v339
      %v479 = vunpack.c.l.b16 %v340
      %v480 = vunpack.c.l.b16 %v341
      %v481 = vunpack.c.l.b16 %v342
      %v482 = vunpack.c.l.b16 %v343
      %v483 = vunpack.c.l.b16 %v344
      %v484 = vunpack.c.l.b16 %v345
      %v485 = vunpack.c.l.b16 %v346
      %v486 = vunpack.c.l.b16 %v347
      %v487 = vunpack.c.l.b16 %v348
      %v488 = vunpack.c.l.b16 %v349
      %v489 = vunpack.c.l.b16 %v350
      %v490 = vunpack.c.l.b16 %v351
      %v491 = vunpack.c.l.b16 %v352
      %v492 = vunpack.c.l.b16 %v353
      %v493 = vunpack.c.l.b16 %v354
      %v494 = vunpack.c.l.b16 %v355
      %v495 = vunpack.c.l.b16 %v356
      %v496 = vunpack.c.l.b16 %v357
      %v497 = vunpack.c.l.b16 %v358
      %v498 = vunpack.c.l.b16 %v359
      %v499 = vunpack.c.l.b16 %v360
      %v500 = vunpack.c.l.b16 %v361
      %v501 = vunpack.c.l.b16 %v362
      %v502 = vunpack.c.l.b16 %v363
      %v503 = vunpack.c.l.b16 %v364
      %v504 = vunpack.c.l.b16 %v365
      %v505 = vunpack.c.l.b16 %v366
      %v506 = vunpack.c.l.b16 %v367
      %v507 = vunpack.c.l.b16 %v368
      %v508 = vunpack.c.l.b16 %v369
      %v509 = vunpack.c.l.b16 %v370
      %v510 = vunpack.c.l.b16 %v371
      %v511 = vunpack.c.l.b16 %v372
      %v512 = vunpack.c.l.b16 %v373
      %v513 = vunpack.c.l.b16 %v374
      %v514 = vunpack.c.l.b16 %v375
      %v515 = vunpack.c.l.b16 %v376
      %v516 = vunpack.c.l.b16 %v377
      %v517 = vunpack.c.l.b16 %v378
      %v518 = vunpack.c.l.b16 %v379
      %v519 = vunpack.c.l.b16 %v380
      %v520 = vunpack.c.l.b16 %v381
      %v521 = vunpack.c.l.b16 %v382
      %v522 = vunpack.c.l.b16 %v383
      %v523 = vunpack.c.l.b16 %v384
      %v524 = vunpack.c.l.b16 %v385
      %v525 = vunpack.c.l.b16 %v386
      %v526 = vunpack.c.l.b16 %v387
      %v527 = vunpack.c.l.b16 %v388
      %v528 = vunpack.c.l.b16 %v389
      %v529 = vunpack.c.l.b16 %v390
      %v530 = vunpack.c.l.b16 %v391
      %v531 = vunpack.c.l.b16 %v392
      %v532 = vunpack.c.l.b16 %v393
      %v533 = vunpack.c.l.b16 %v394
      %v534 = vunpack.c.l.b16 %v395
      %v535 = vpack.c.b16 %v472, %v471
      %v536 = vpack.c.b16 %v474, %v473
      %v537 = vpack.c.b16 %v476, %v475
      %v538 = vpack.c.b16 %v478, %v477
      %v539 = vpack.c.b16 %v480, %v479
      %v540 = vpack.c.b16 %v482, %v481
      %v541 = vpack.c.b16 %v484, %v483
      %v542 = vpack.c.b16 %v486, %v485
      %v543 = vpack.c.b16 %v488, %v487
      %v544 = vpack.c.b16 %v490, %v489
      %v545 = vpack.c.b16 %v492, %v491
      %v546 = vpack.c.b16 %v494, %v493
      %v547 = vpack.c.b16 %v496, %v495
      %v548 = vpack.c.b16 %v498, %v497
      %v549 = vpack.c.b16 %v500, %v499
      %v550 = vpack.c.b16 %v502, %v501
      %v551 = vpack.c.b16 %v504, %v503
      %v552 = vpack.c.b16 %v506, %v505
      %v553 = vpack.c.b16 %v508, %v507
      %v554 = vpack.c.b16 %v510, %v509
      %v555 = vpack.c.b16 %v512, %v511
      %v556 = vpack.c.b16 %v514, %v513
      %v557 = vpack.c.b16 %v516, %v515
      %v558 = vpack.c.b16 %v518, %v517
      %v559 = vpack.c.b16 %v520, %v519
      %v560 = vpack.c.b16 %v522, %v521
      %v561 = vpack.c.b16 %v524, %v523
      %v562 = vpack.c.b16 %v526, %v525
      %v563 = vpack.c.b16 %v528, %v527
      %v564 = vpack.c.b16 %v530, %v529
      %v565 = vpack.c.b16 %v532, %v531
      %v566 = vpack.c.b16 %v534, %v533
      %v571 = vunpack.c.l.b16 %v396
      %v572 = vunpack.c.l.b16 %v397
      %v573 = vunpack.c.l.b16 %v398
      %v574 = vunpack.c.l.b16 %v399
      %v575 = vpack.c.b16 %v572, %v571
      %v576 = vpack.c.b16 %v574, %v573
      %vm579 = vcmask 261120
      %v581 = vsel %vm579, %v535, 0
      %v584 = vsel %vm579, %v536, 0
      %v587 = vsel %vm579, %v537, 0
      %v590 = vsel %vm579, %v538, 0
      %v593 = vsel %vm579, %v539, 0
      %v596 = vsel %vm579, %v540, 0
      %v599 = vsel %vm579, %v541, 0
      %v602 = vsel %vm579, %v542, 0
      %v605 = vsel %vm579, %v543, 0
      %v608 = vsel %vm579, %v544, 0
      %v611 = vsel %vm579, %v545, 0
      %v614 = vsel %vm579, %v546, 0
      %v617 = vsel %vm579, %v547, 0
      %v620 = vsel %vm579, %v548, 0
      %v623 = vsel %vm579, %v549, 0
      %v626 = vsel %vm579, %v550, 0
      %v629 = vsel %vm579, %v551, 0
      %v632 = vsel %vm579, %v552, 0
      %v635 = vsel %vm579, %v553, 0
      %v638 = vsel %vm579, %v554, 0
      %v641 = vsel %vm579, %v555, 0
      %v644 = vsel %vm579, %v556, 0
      %v647 = vsel %vm579, %v557, 0
      %v650 = vsel %vm579, %v558, 0
      %v653 = vsel %vm579, %v559, 0
      %v656 = vsel %vm579, %v560, 0
      %v659 = vsel %vm579, %v561, 0
      %v662 = vsel %vm579, %v562, 0
      %v665 = vsel %vm579, %v563, 0
      %v668 = vsel %vm579, %v564, 0
      %v671 = vsel %vm579, %v565, 0
      %v674 = vsel %vm579, %v566, 0
      %676 = vmatprep.subr.bf16.mxu0 0
      %677 = vmatpush1.bf16.msra.mxu0 0
      %678 = vmatprep.subr.bf16.mxu0 0
      %679 = vmatpush1.bf16.msra.mxu0 0
      %680 = vmatprep.subr.bf16.mxu0 0
      %681 = vmatpush1.bf16.msra.mxu0 0
      %682 = vmatprep.subr.bf16.mxu0 0
      %683 = vmatpush1.bf16.msra.mxu0 0
      %684 = vmatprep.subr.bf16.mxu0 0
      %685 = vmatpush1.bf16.msra.mxu0 0
      %686 = vmatprep.subr.bf16.mxu0 0
      %687 = vmatpush1.bf16.msra.mxu0 0
      %688 = vmatprep.subr.bf16.mxu0 0
      %689 = vmatpush1.bf16.msra.mxu0 %v576
      %690 = vmatprep.subr.bf16.mxu0 0
      %691 = vmatpush1.bf16.msra.mxu0 %v575
      %692 = vmatprep.subr.bf16.mxu0 0
      %693 = vmatpush2.bf16.msra.mxu0 0
      %694 = vmatprep.subr.bf16.mxu0 0
      %695 = vmatpush2.bf16.msra.mxu0 0
      %696 = vmatprep.subr.bf16.mxu0 0
      %697 = vmatpush2.bf16.msra.mxu0 0
      %698 = vmatprep.subr.bf16.mxu0 0
      %699 = vmatpush2.bf16.msra.mxu0 0
      %700 = vmatprep.subr.bf16.mxu0 0
      %701 = vmatpush2.bf16.msra.mxu0 0
      %702 = vmatprep.subr.bf16.mxu0 0
      %703 = vmatpush2.bf16.msra.mxu0 0
      %704 = vmatprep.subr.bf16.mxu0 0
      %705 = vmatpush2.bf16.msra.mxu0 0
      %706 = vmatprep.subr.bf16.mxu0 0
      %707 = vmatpush2.bf16.msra.mxu0 0
      %708 = vmatprep.mubr.bf16.mxu0 0
      %709 = vmatmul.mubr.bf16.gmra.mxu0 %v581
      %v710 = vpop.f32.mrf.mxu0
      %v711 = vadd.f32 %v405, %v710
      %v712 = vpop.f32.mrf.mxu0
      %v713 = vpop.f32.mrf.mxu0
      %v714 = vadd.f32 %v405, %v713
      %v715 = vpop.f32.mrf.mxu0
      %716 = vmatprep.mubr.bf16.mxu0 0
      %717 = vmatmul.mubr.bf16.gmra.mxu0 %v584
      %v718 = vpop.f32.mrf.mxu0
      %v719 = vadd.f32 %v405, %v718
      %v720 = vpop.f32.mrf.mxu0
      %v721 = vpop.f32.mrf.mxu0
      %v722 = vadd.f32 %v405, %v721
      %v723 = vpop.f32.mrf.mxu0
      %724 = vmatprep.mubr.bf16.mxu0 0
      %725 = vmatmul.mubr.bf16.gmra.mxu0 %v587
      %v726 = vpop.f32.mrf.mxu0
      %v727 = vadd.f32 %v405, %v726
      %v728 = vpop.f32.mrf.mxu0
      %v729 = vpop.f32.mrf.mxu0
      %v730 = vadd.f32 %v405, %v729
      %v731 = vpop.f32.mrf.mxu0
      %732 = vmatprep.mubr.bf16.mxu0 0
      %733 = vmatmul.mubr.bf16.gmra.mxu0 %v590
      %v734 = vpop.f32.mrf.mxu0
      %v735 = vadd.f32 %v405, %v734
      %v736 = vpop.f32.mrf.mxu0
      %v737 = vpop.f32.mrf.mxu0
      %v738 = vadd.f32 %v405, %v737
      %v739 = vpop.f32.mrf.mxu0
      %740 = vmatprep.mubr.bf16.mxu0 0
      %741 = vmatmul.mubr.bf16.gmra.mxu0 %v593
      %v742 = vpop.f32.mrf.mxu0
      %v743 = vadd.f32 %v405, %v742
      %v744 = vpop.f32.mrf.mxu0
      %v745 = vpop.f32.mrf.mxu0
      %v746 = vadd.f32 %v405, %v745
      %v747 = vpop.f32.mrf.mxu0
      %748 = vmatprep.mubr.bf16.mxu0 0
      %749 = vmatmul.mubr.bf16.gmra.mxu0 %v596
      %v750 = vpop.f32.mrf.mxu0
      %v751 = vadd.f32 %v405, %v750
      %v752 = vpop.f32.mrf.mxu0
      %v753 = vpop.f32.mrf.mxu0
      %v754 = vadd.f32 %v405, %v753
      %v755 = vpop.f32.mrf.mxu0
      %756 = vmatprep.mubr.bf16.mxu0 0
      %757 = vmatmul.mubr.bf16.gmra.mxu0 %v599
      %v758 = vpop.f32.mrf.mxu0
      %v759 = vadd.f32 %v405, %v758
      %v760 = vpop.f32.mrf.mxu0
      %v761 = vpop.f32.mrf.mxu0
      %v762 = vadd.f32 %v405, %v761
      %v763 = vpop.f32.mrf.mxu0
      %764 = vmatprep.mubr.bf16.mxu0 0
      %765 = vmatmul.mubr.bf16.gmra.mxu0 %v602
      %v766 = vpop.f32.mrf.mxu0
      %v767 = vadd.f32 %v405, %v766
      %v768 = vpop.f32.mrf.mxu0
      %v769 = vpop.f32.mrf.mxu0
      %v770 = vadd.f32 %v405, %v769
      %v771 = vpop.f32.mrf.mxu0
      %772 = vmatprep.mubr.bf16.mxu0 0
      %773 = vmatmul.mubr.bf16.gmra.mxu0 %v605
      %v774 = vpop.f32.mrf.mxu0
      %v775 = vadd.f32 %v405, %v774
      %v776 = vpop.f32.mrf.mxu0
      %v777 = vpop.f32.mrf.mxu0
      %v778 = vadd.f32 %v405, %v777
      %v779 = vpop.f32.mrf.mxu0
      %780 = vmatprep.mubr.bf16.mxu0 0
      %781 = vmatmul.mubr.bf16.gmra.mxu0 %v608
      %v782 = vpop.f32.mrf.mxu0
      %v783 = vadd.f32 %v405, %v782
      %v784 = vpop.f32.mrf.mxu0
      %v785 = vpop.f32.mrf.mxu0
      %v786 = vadd.f32 %v405, %v785
      %v787 = vpop.f32.mrf.mxu0
      %788 = vmatprep.mubr.bf16.mxu0 0
      %789 = vmatmul.mubr.bf16.gmra.mxu0 %v611
      %v790 = vpop.f32.mrf.mxu0
      %v791 = vadd.f32 %v405, %v790
      %v792 = vpop.f32.mrf.mxu0
      %v793 = vpop.f32.mrf.mxu0
      %v794 = vadd.f32 %v405, %v793
      %v795 = vpop.f32.mrf.mxu0
      %796 = vmatprep.mubr.bf16.mxu0 0
      %797 = vmatmul.mubr.bf16.gmra.mxu0 %v614
      %v798 = vpop.f32.mrf.mxu0
      %v799 = vadd.f32 %v405, %v798
      %v800 = vpop.f32.mrf.mxu0
      %v801 = vpop.f32.mrf.mxu0
      %v802 = vadd.f32 %v405, %v801
      %v803 = vpop.f32.mrf.mxu0
      %804 = vmatprep.mubr.bf16.mxu0 0
      %805 = vmatmul.mubr.bf16.gmra.mxu0 %v617
      %v806 = vpop.f32.mrf.mxu0
      %v807 = vadd.f32 %v405, %v806
      %v808 = vpop.f32.mrf.mxu0
      %v809 = vpop.f32.mrf.mxu0
      %v810 = vadd.f32 %v405, %v809
      %v811 = vpop.f32.mrf.mxu0
      %812 = vmatprep.mubr.bf16.mxu0 0
      %813 = vmatmul.mubr.bf16.gmra.mxu0 %v620
      %v814 = vpop.f32.mrf.mxu0
      %v815 = vadd.f32 %v405, %v814
      %v816 = vpop.f32.mrf.mxu0
      %v817 = vpop.f32.mrf.mxu0
      %v818 = vadd.f32 %v405, %v817
      %v819 = vpop.f32.mrf.mxu0
      %820 = vmatprep.mubr.bf16.mxu0 0
      %821 = vmatmul.mubr.bf16.gmra.mxu0 %v623
      %v822 = vpop.f32.mrf.mxu0
      %v823 = vadd.f32 %v405, %v822
      %v824 = vpop.f32.mrf.mxu0
      %v825 = vpop.f32.mrf.mxu0
      %v826 = vadd.f32 %v405, %v825
      %v827 = vpop.f32.mrf.mxu0
      %828 = vmatprep.mubr.bf16.mxu0 0
      %829 = vmatmul.mubr.bf16.gmra.mxu0 %v626
      %v830 = vpop.f32.mrf.mxu0
      %v831 = vadd.f32 %v405, %v830
      %v832 = vpop.f32.mrf.mxu0
      %v833 = vpop.f32.mrf.mxu0
      %v834 = vadd.f32 %v405, %v833
      %v835 = vpop.f32.mrf.mxu0
      %836 = vmatprep.mubr.bf16.mxu0 0
      %837 = vmatmul.mubr.bf16.gmra.mxu0 %v629
      %v838 = vpop.f32.mrf.mxu0
      %v839 = vadd.f32 %v405, %v838
      %v840 = vpop.f32.mrf.mxu0
      %v841 = vpop.f32.mrf.mxu0
      %v842 = vadd.f32 %v405, %v841
      %v843 = vpop.f32.mrf.mxu0
      %844 = vmatprep.mubr.bf16.mxu0 0
      %845 = vmatmul.mubr.bf16.gmra.mxu0 %v632
      %v846 = vpop.f32.mrf.mxu0
      %v847 = vadd.f32 %v405, %v846
      %v848 = vpop.f32.mrf.mxu0
      %v849 = vpop.f32.mrf.mxu0
      %v850 = vadd.f32 %v405, %v849
      %v851 = vpop.f32.mrf.mxu0
      %852 = vmatprep.mubr.bf16.mxu0 0
      %853 = vmatmul.mubr.bf16.gmra.mxu0 %v635
      %v854 = vpop.f32.mrf.mxu0
      %v855 = vadd.f32 %v405, %v854
      %v856 = vpop.f32.mrf.mxu0
      %v857 = vpop.f32.mrf.mxu0
      %v858 = vadd.f32 %v405, %v857
      %v859 = vpop.f32.mrf.mxu0
      %860 = vmatprep.mubr.bf16.mxu0 0
      %861 = vmatmul.mubr.bf16.gmra.mxu0 %v638
      %v862 = vpop.f32.mrf.mxu0
      %v863 = vadd.f32 %v405, %v862
      %v864 = vpop.f32.mrf.mxu0
      %v865 = vpop.f32.mrf.mxu0
      %v866 = vadd.f32 %v405, %v865
      %v867 = vpop.f32.mrf.mxu0
      %868 = vmatprep.mubr.bf16.mxu0 0
      %869 = vmatmul.mubr.bf16.gmra.mxu0 %v641
      %v870 = vpop.f32.mrf.mxu0
      %v871 = vadd.f32 %v405, %v870
      %v872 = vpop.f32.mrf.mxu0
      %v873 = vpop.f32.mrf.mxu0
      %v874 = vadd.f32 %v405, %v873
      %v875 = vpop.f32.mrf.mxu0
      %876 = vmatprep.mubr.bf16.mxu0 0
      %877 = vmatmul.mubr.bf16.gmra.mxu0 %v644
      %v878 = vpop.f32.mrf.mxu0
      %v879 = vadd.f32 %v405, %v878
      %v880 = vpop.f32.mrf.mxu0
      %v881 = vpop.f32.mrf.mxu0
      %v882 = vadd.f32 %v405, %v881
      %v883 = vpop.f32.mrf.mxu0
      %884 = vmatprep.mubr.bf16.mxu0 0
      %885 = vmatmul.mubr.bf16.gmra.mxu0 %v647
      %v886 = vpop.f32.mrf.mxu0
      %v887 = vadd.f32 %v405, %v886
      %v888 = vpop.f32.mrf.mxu0
      %v889 = vpop.f32.mrf.mxu0
      %v890 = vadd.f32 %v405, %v889
      %v891 = vpop.f32.mrf.mxu0
      %892 = vmatprep.mubr.bf16.mxu0 0
      %893 = vmatmul.mubr.bf16.gmra.mxu0 %v650
      %v894 = vpop.f32.mrf.mxu0
      %v895 = vadd.f32 %v405, %v894
      %v896 = vpop.f32.mrf.mxu0
      %v897 = vpop.f32.mrf.mxu0
      %v898 = vadd.f32 %v405, %v897
      %v899 = vpop.f32.mrf.mxu0
      %900 = vmatprep.mubr.bf16.mxu0 0
      %901 = vmatmul.mubr.bf16.gmra.mxu0 %v653
      %v902 = vpop.f32.mrf.mxu0
      %v903 = vadd.f32 %v405, %v902
      %v904 = vpop.f32.mrf.mxu0
      %v905 = vpop.f32.mrf.mxu0
      %v906 = vadd.f32 %v405, %v905
      %v907 = vpop.f32.mrf.mxu0
      %908 = vmatprep.mubr.bf16.mxu0 0
      %909 = vmatmul.mubr.bf16.gmra.mxu0 %v656
      %v910 = vpop.f32.mrf.mxu0
      %v911 = vadd.f32 %v405, %v910
      %v912 = vpop.f32.mrf.mxu0
      %v913 = vpop.f32.mrf.mxu0
      %v914 = vadd.f32 %v405, %v913
      %v915 = vpop.f32.mrf.mxu0
      %916 = vmatprep.mubr.bf16.mxu0 0
      %917 = vmatmul.mubr.bf16.gmra.mxu0 %v659
      %v918 = vpop.f32.mrf.mxu0
      %v919 = vadd.f32 %v405, %v918
      %v920 = vpop.f32.mrf.mxu0
      %v921 = vpop.f32.mrf.mxu0
      %v922 = vadd.f32 %v405, %v921
      %v923 = vpop.f32.mrf.mxu0
      %924 = vmatprep.mubr.bf16.mxu0 0
      %925 = vmatmul.mubr.bf16.gmra.mxu0 %v662
      %v926 = vpop.f32.mrf.mxu0
      %v927 = vadd.f32 %v405, %v926
      %v928 = vpop.f32.mrf.mxu0
      %v929 = vpop.f32.mrf.mxu0
      %v930 = vadd.f32 %v405, %v929
      %v931 = vpop.f32.mrf.mxu0
      %932 = vmatprep.mubr.bf16.mxu0 0
      %933 = vmatmul.mubr.bf16.gmra.mxu0 %v665
      %v934 = vpop.f32.mrf.mxu0
      %v935 = vadd.f32 %v405, %v934
      %v936 = vpop.f32.mrf.mxu0
      %v937 = vpop.f32.mrf.mxu0
      %v938 = vadd.f32 %v405, %v937
      %v939 = vpop.f32.mrf.mxu0
      %940 = vmatprep.mubr.bf16.mxu0 0
      %941 = vmatmul.mubr.bf16.gmra.mxu0 %v668
      %v942 = vpop.f32.mrf.mxu0
      %v943 = vadd.f32 %v405, %v942
      %v944 = vpop.f32.mrf.mxu0
      %v945 = vpop.f32.mrf.mxu0
      %v946 = vadd.f32 %v405, %v945
      %v947 = vpop.f32.mrf.mxu0
      %948 = vmatprep.mubr.bf16.mxu0 0
      %949 = vmatmul.mubr.bf16.gmra.mxu0 %v671
      %v950 = vpop.f32.mrf.mxu0
      %v951 = vadd.f32 %v405, %v950
      %v952 = vpop.f32.mrf.mxu0
      %v953 = vpop.f32.mrf.mxu0
      %v954 = vadd.f32 %v405, %v953
      %v955 = vpop.f32.mrf.mxu0
      %956 = vmatprep.mubr.bf16.mxu0 0
      %957 = vmatmul.mubr.bf16.gmra.mxu0 %v674
      %v958 = vpop.f32.mrf.mxu0
      %v959 = vadd.f32 %v405, %v958
      %v960 = vpop.f32.mrf.mxu0
      %v961 = vpop.f32.mrf.mxu0
      %v962 = vadd.f32 %v405, %v961
      %v963 = vpop.f32.mrf.mxu0
      %964 = vdwg.mxu0
      %v965 = vmax.f32 %v711, 0.0
      %v966 = vmax.f32 %v714, 0.0
      %v967 = vmax.f32 %v719, 0.0
      %v968 = vmax.f32 %v722, 0.0
      %v969 = vmax.f32 %v727, 0.0
      %v970 = vmax.f32 %v730, 0.0
      %v971 = vmax.f32 %v735, 0.0
      %v972 = vmax.f32 %v738, 0.0
      %v973 = vmax.f32 %v743, 0.0
      %v974 = vmax.f32 %v746, 0.0
      %v975 = vmax.f32 %v751, 0.0
      %v976 = vmax.f32 %v754, 0.0
      %v977 = vmax.f32 %v759, 0.0
      %v978 = vmax.f32 %v762, 0.0
      %v979 = vmax.f32 %v767, 0.0
      %v980 = vmax.f32 %v770, 0.0
      %v981 = vmax.f32 %v775, 0.0
      %v982 = vmax.f32 %v778, 0.0
      %v983 = vmax.f32 %v783, 0.0
      %v984 = vmax.f32 %v786, 0.0
      %v985 = vmax.f32 %v791, 0.0
      %v986 = vmax.f32 %v794, 0.0
      %v987 = vmax.f32 %v799, 0.0
      %v988 = vmax.f32 %v802, 0.0
      %v989 = vmax.f32 %v807, 0.0
      %v990 = vmax.f32 %v810, 0.0
      %v991 = vmax.f32 %v815, 0.0
      %v992 = vmax.f32 %v818, 0.0
      %v993 = vmax.f32 %v823, 0.0
      %v994 = vmax.f32 %v826, 0.0
      %v995 = vmax.f32 %v831, 0.0
      %v996 = vmax.f32 %v834, 0.0
      %v997 = vmax.f32 %v839, 0.0
      %v998 = vmax.f32 %v842, 0.0
      %v999 = vmax.f32 %v847, 0.0
      %v1000 = vmax.f32 %v850, 0.0
      %v1001 = vmax.f32 %v855, 0.0
      %v1002 = vmax.f32 %v858, 0.0
      %v1003 = vmax.f32 %v863, 0.0
      %v1004 = vmax.f32 %v866, 0.0
      %v1005 = vmax.f32 %v871, 0.0
      %v1006 = vmax.f32 %v874, 0.0
      %v1007 = vmax.f32 %v879, 0.0
      %v1008 = vmax.f32 %v882, 0.0
      %v1009 = vmax.f32 %v887, 0.0
      %v1010 = vmax.f32 %v890, 0.0
      %v1011 = vmax.f32 %v895, 0.0
      %v1012 = vmax.f32 %v898, 0.0
      %v1013 = vmax.f32 %v903, 0.0
      %v1014 = vmax.f32 %v906, 0.0
      %v1015 = vmax.f32 %v911, 0.0
      %v1016 = vmax.f32 %v914, 0.0
      %v1017 = vmax.f32 %v919, 0.0
      %v1018 = vmax.f32 %v922, 0.0
      %v1019 = vmax.f32 %v927, 0.0
      %v1020 = vmax.f32 %v930, 0.0
      %v1021 = vmax.f32 %v935, 0.0
      %v1022 = vmax.f32 %v938, 0.0
      %v1023 = vmax.f32 %v943, 0.0
      %v1024 = vmax.f32 %v946, 0.0
      %v1025 = vmax.f32 %v951, 0.0
      %v1026 = vmax.f32 %v954, 0.0
      %v1027 = vmax.f32 %v959, 0.0
      %v1028 = vmax.f32 %v962, 0.0
      %v1029 = vpack.c.bf16 %v966, %v965
      %v1030 = vpack.c.bf16 %v968, %v967
      %v1031 = vpack.c.bf16 %v970, %v969
      %v1032 = vpack.c.bf16 %v972, %v971
      %v1033 = vpack.c.bf16 %v974, %v973
      %v1034 = vpack.c.bf16 %v976, %v975
      %v1035 = vpack.c.bf16 %v978, %v977
      %v1036 = vpack.c.bf16 %v980, %v979
      %v1037 = vpack.c.bf16 %v982, %v981
      %v1038 = vpack.c.bf16 %v984, %v983
      %v1039 = vpack.c.bf16 %v986, %v985
      %v1040 = vpack.c.bf16 %v988, %v987
      %v1041 = vpack.c.bf16 %v990, %v989
      %v1042 = vpack.c.bf16 %v992, %v991
      %v1043 = vpack.c.bf16 %v994, %v993
      %v1044 = vpack.c.bf16 %v996, %v995
      %v1045 = vpack.c.bf16 %v998, %v997
      %v1046 = vpack.c.bf16 %v1000, %v999
      %v1047 = vpack.c.bf16 %v1002, %v1001
      %v1048 = vpack.c.bf16 %v1004, %v1003
      %v1049 = vpack.c.bf16 %v1006, %v1005
      %v1050 = vpack.c.bf16 %v1008, %v1007
      %v1051 = vpack.c.bf16 %v1010, %v1009
      %v1052 = vpack.c.bf16 %v1012, %v1011
      %v1053 = vpack.c.bf16 %v1014, %v1013
      %v1054 = vpack.c.bf16 %v1016, %v1015
      %v1055 = vpack.c.bf16 %v1018, %v1017
      %v1056 = vpack.c.bf16 %v1020, %v1019
      %v1057 = vpack.c.bf16 %v1022, %v1021
      %v1058 = vpack.c.bf16 %v1024, %v1023
      %v1059 = vpack.c.bf16 %v1026, %v1025
      %v1060 = vpack.c.bf16 %v1028, %v1027
      %v1061 = vld [vmem:[%s4] sm:$0xf]
      %v1062 = vld [vmem:[%s4 + $0x4] sm:$0xf]
      %v1063 = vld [vmem:[%s4 + $0x8] sm:$0xf]
      %v1064 = vld [vmem:[%s4 + $0xc] sm:$0xf]
      %v1065 = vld [vmem:[%s4 + $0x10] sm:$0xf]
      %v1066 = vld [vmem:[%s4 + $0x14] sm:$0xf]
      %v1067 = vld [vmem:[%s4 + $0x18] sm:$0xf]
      %v1068 = vld [vmem:[%s4 + $0x1c] sm:$0xf]
      %v1069 = vld [vmem:[%s4 + $0x20] sm:$0xf]
      %v1070 = vld [vmem:[%s4 + $0x24] sm:$0xf]
      %v1071 = vld [vmem:[%s4 + $0x28] sm:$0xf]
      %v1072 = vld [vmem:[%s4 + $0x2c] sm:$0xf]
      %v1073 = vld [vmem:[%s4 + $0x30] sm:$0xf]
      %v1074 = vld [vmem:[%s4 + $0x34] sm:$0xf]
      %v1075 = vld [vmem:[%s4 + $0x38] sm:$0xf]
      %v1076 = vld [vmem:[%s4 + $0x3c] sm:$0xf]
      %v1077 = vld [vmem:[%s5] sm:$0x1]
      %v1079 = vlaneseq
      %v1080 = vshrl.u32 %v1079, 7
      %v1081 = vsub.s32 0, %v1080
      %v1082 = vrot.slane %v1077, %v1081
      %v1100 = vunpack.c.l.b16 %v1061
      %v1101 = vunpack.c.l.b16 %v1062
      %v1102 = vunpack.c.l.b16 %v1063
      %v1103 = vunpack.c.l.b16 %v1064
      %v1104 = vunpack.c.l.b16 %v1065
      %v1105 = vunpack.c.l.b16 %v1066
      %v1106 = vunpack.c.l.b16 %v1067
      %v1107 = vunpack.c.l.b16 %v1068
      %v1108 = vunpack.c.l.b16 %v1069
      %v1109 = vunpack.c.l.b16 %v1070
      %v1110 = vunpack.c.l.b16 %v1071
      %v1111 = vunpack.c.l.b16 %v1072
      %v1112 = vunpack.c.l.b16 %v1073
      %v1113 = vunpack.c.l.b16 %v1074
      %v1114 = vunpack.c.l.b16 %v1075
      %v1115 = vunpack.c.l.b16 %v1076
      %v1116 = vpack.c.b16 %v1101, %v1100
      %v1117 = vpack.c.b16 %v1103, %v1102
      %v1118 = vpack.c.b16 %v1105, %v1104
      %v1119 = vpack.c.b16 %v1107, %v1106
      %v1120 = vpack.c.b16 %v1109, %v1108
      %v1121 = vpack.c.b16 %v1111, %v1110
      %v1122 = vpack.c.b16 %v1113, %v1112
      %v1123 = vpack.c.b16 %v1115, %v1114
      %1132 = vmatprep.subr.bf16.mxu0 0
      %1133 = vmatpush1.bf16.msra.mxu0 %v1123
      %1134 = vmatprep.subr.bf16.mxu0 0
      %1135 = vmatpush1.bf16.msra.mxu0 %v1122
      %1136 = vmatprep.subr.bf16.mxu0 0
      %1137 = vmatpush1.bf16.msra.mxu0 %v1121
      %1138 = vmatprep.subr.bf16.mxu0 0
      %1139 = vmatpush1.bf16.msra.mxu0 %v1120
      %1140 = vmatprep.subr.bf16.mxu0 0
      %1141 = vmatpush1.bf16.msra.mxu0 %v1119
      %1142 = vmatprep.subr.bf16.mxu0 0
      %1143 = vmatpush1.bf16.msra.mxu0 %v1118
      %1144 = vmatprep.subr.bf16.mxu0 0
      %1145 = vmatpush1.bf16.msra.mxu0 %v1117
      %1146 = vmatprep.subr.bf16.mxu0 0
      %1147 = vmatpush1.bf16.msra.mxu0 %v1116
      %1148 = vmatprep.subr.bf16.mxu0 0
      %1149 = vmatpush2.bf16.msra.mxu0 0
      %1150 = vmatprep.subr.bf16.mxu0 0
      %1151 = vmatpush2.bf16.msra.mxu0 0
      %1152 = vmatprep.subr.bf16.mxu0 0
      %1153 = vmatpush2.bf16.msra.mxu0 0
      %1154 = vmatprep.subr.bf16.mxu0 0
      %1155 = vmatpush2.bf16.msra.mxu0 0
      %1156 = vmatprep.subr.bf16.mxu0 0
      %1157 = vmatpush2.bf16.msra.mxu0 0
      %1158 = vmatprep.subr.bf16.mxu0 0
      %1159 = vmatpush2.bf16.msra.mxu0 0
      %1160 = vmatprep.subr.bf16.mxu0 0
      %1161 = vmatpush2.bf16.msra.mxu0 0
      %1162 = vmatprep.subr.bf16.mxu0 0
      %1163 = vmatpush2.bf16.msra.mxu0 0
      %1164 = vmatprep.mubr.bf16.mxu0 0
      %1165 = vmatmul.mubr.bf16.gmra.mxu0 %v1029
      %v1166 = vpop.f32.mrf.mxu0
      %v1167 = vadd.f32 %v1082, %v1166
      %v1168 = vpop.f32.mrf.mxu0
      %v1169 = vpop.f32.mrf.mxu0
      %v1170 = vadd.f32 %v1082, %v1169
      %v1171 = vpop.f32.mrf.mxu0
      %1172 = vmatprep.mubr.bf16.mxu0 0
      %1173 = vmatmul.mubr.bf16.gmra.mxu0 %v1030
      %v1174 = vpop.f32.mrf.mxu0
      %v1175 = vadd.f32 %v1082, %v1174
      %v1176 = vpop.f32.mrf.mxu0
      %v1177 = vpop.f32.mrf.mxu0
      %v1178 = vadd.f32 %v1082, %v1177
      %v1179 = vpop.f32.mrf.mxu0
      %1180 = vmatprep.mubr.bf16.mxu0 0
      %1181 = vmatmul.mubr.bf16.gmra.mxu0 %v1031
      %v1182 = vpop.f32.mrf.mxu0
      %v1183 = vadd.f32 %v1082, %v1182
      %v1184 = vpop.f32.mrf.mxu0
      %v1185 = vpop.f32.mrf.mxu0
      %v1186 = vadd.f32 %v1082, %v1185
      %v1187 = vpop.f32.mrf.mxu0
      %1188 = vmatprep.mubr.bf16.mxu0 0
      %1189 = vmatmul.mubr.bf16.gmra.mxu0 %v1032
      %v1190 = vpop.f32.mrf.mxu0
      %v1191 = vadd.f32 %v1082, %v1190
      %v1192 = vpop.f32.mrf.mxu0
      %v1193 = vpop.f32.mrf.mxu0
      %v1194 = vadd.f32 %v1082, %v1193
      %v1195 = vpop.f32.mrf.mxu0
      %1196 = vmatprep.mubr.bf16.mxu0 0
      %1197 = vmatmul.mubr.bf16.gmra.mxu0 %v1033
      %v1198 = vpop.f32.mrf.mxu0
      %v1199 = vadd.f32 %v1082, %v1198
      %v1200 = vpop.f32.mrf.mxu0
      %v1201 = vpop.f32.mrf.mxu0
      %v1202 = vadd.f32 %v1082, %v1201
      %v1203 = vpop.f32.mrf.mxu0
      %1204 = vmatprep.mubr.bf16.mxu0 0
      %1205 = vmatmul.mubr.bf16.gmra.mxu0 %v1034
      %v1206 = vpop.f32.mrf.mxu0
      %v1207 = vadd.f32 %v1082, %v1206
      %v1208 = vpop.f32.mrf.mxu0
      %v1209 = vpop.f32.mrf.mxu0
      %v1210 = vadd.f32 %v1082, %v1209
      %v1211 = vpop.f32.mrf.mxu0
      %1212 = vmatprep.mubr.bf16.mxu0 0
      %1213 = vmatmul.mubr.bf16.gmra.mxu0 %v1035
      %v1214 = vpop.f32.mrf.mxu0
      %v1215 = vadd.f32 %v1082, %v1214
      %v1216 = vpop.f32.mrf.mxu0
      %v1217 = vpop.f32.mrf.mxu0
      %v1218 = vadd.f32 %v1082, %v1217
      %v1219 = vpop.f32.mrf.mxu0
      %1220 = vmatprep.mubr.bf16.mxu0 0
      %1221 = vmatmul.mubr.bf16.gmra.mxu0 %v1036
      %v1222 = vpop.f32.mrf.mxu0
      %v1223 = vadd.f32 %v1082, %v1222
      %v1224 = vpop.f32.mrf.mxu0
      %v1225 = vpop.f32.mrf.mxu0
      %v1226 = vadd.f32 %v1082, %v1225
      %v1227 = vpop.f32.mrf.mxu0
      %1228 = vmatprep.mubr.bf16.mxu0 0
      %1229 = vmatmul.mubr.bf16.gmra.mxu0 %v1037
      %v1230 = vpop.f32.mrf.mxu0
      %v1231 = vadd.f32 %v1082, %v1230
      %v1232 = vpop.f32.mrf.mxu0
      %v1233 = vpop.f32.mrf.mxu0
      %v1234 = vadd.f32 %v1082, %v1233
      %v1235 = vpop.f32.mrf.mxu0
      %1236 = vmatprep.mubr.bf16.mxu0 0
      %1237 = vmatmul.mubr.bf16.gmra.mxu0 %v1038
      %v1238 = vpop.f32.mrf.mxu0
      %v1239 = vadd.f32 %v1082, %v1238
      %v1240 = vpop.f32.mrf.mxu0
      %v1241 = vpop.f32.mrf.mxu0
      %v1242 = vadd.f32 %v1082, %v1241
      %v1243 = vpop.f32.mrf.mxu0
      %1244 = vmatprep.mubr.bf16.mxu0 0
      %1245 = vmatmul.mubr.bf16.gmra.mxu0 %v1039
      %v1246 = vpop.f32.mrf.mxu0
      %v1247 = vadd.f32 %v1082, %v1246
      %v1248 = vpop.f32.mrf.mxu0
      %v1249 = vpop.f32.mrf.mxu0
      %v1250 = vadd.f32 %v1082, %v1249
      %v1251 = vpop.f32.mrf.mxu0
      %1252 = vmatprep.mubr.bf16.mxu0 0
      %1253 = vmatmul.mubr.bf16.gmra.mxu0 %v1040
      %v1254 = vpop.f32.mrf.mxu0
      %v1255 = vadd.f32 %v1082, %v1254
      %v1256 = vpop.f32.mrf.mxu0
      %v1257 = vpop.f32.mrf.mxu0
      %v1258 = vadd.f32 %v1082, %v1257
      %v1259 = vpop.f32.mrf.mxu0
      %1260 = vmatprep.mubr.bf16.mxu0 0
      %1261 = vmatmul.mubr.bf16.gmra.mxu0 %v1041
      %v1262 = vpop.f32.mrf.mxu0
      %v1263 = vadd.f32 %v1082, %v1262
      %v1264 = vpop.f32.mrf.mxu0
      %v1265 = vpop.f32.mrf.mxu0
      %v1266 = vadd.f32 %v1082, %v1265
      %v1267 = vpop.f32.mrf.mxu0
      %1268 = vmatprep.mubr.bf16.mxu0 0
      %1269 = vmatmul.mubr.bf16.gmra.mxu0 %v1042
      %v1270 = vpop.f32.mrf.mxu0
      %v1271 = vadd.f32 %v1082, %v1270
      %v1272 = vpop.f32.mrf.mxu0
      %v1273 = vpop.f32.mrf.mxu0
      %v1274 = vadd.f32 %v1082, %v1273
      %v1275 = vpop.f32.mrf.mxu0
      %1276 = vmatprep.mubr.bf16.mxu0 0
      %1277 = vmatmul.mubr.bf16.gmra.mxu0 %v1043
      %v1278 = vpop.f32.mrf.mxu0
      %v1279 = vadd.f32 %v1082, %v1278
      %v1280 = vpop.f32.mrf.mxu0
      %v1281 = vpop.f32.mrf.mxu0
      %v1282 = vadd.f32 %v1082, %v1281
      %v1283 = vpop.f32.mrf.mxu0
      %1284 = vmatprep.mubr.bf16.mxu0 0
      %1285 = vmatmul.mubr.bf16.gmra.mxu0 %v1044
      %v1286 = vpop.f32.mrf.mxu0
      %v1287 = vadd.f32 %v1082, %v1286
      %v1288 = vpop.f32.mrf.mxu0
      %v1289 = vpop.f32.mrf.mxu0
      %v1290 = vadd.f32 %v1082, %v1289
      %v1291 = vpop.f32.mrf.mxu0
      %1292 = vmatprep.mubr.bf16.mxu0 0
      %1293 = vmatmul.mubr.bf16.gmra.mxu0 %v1045
      %v1294 = vpop.f32.mrf.mxu0
      %v1295 = vadd.f32 %v1082, %v1294
      %v1296 = vpop.f32.mrf.mxu0
      %v1297 = vpop.f32.mrf.mxu0
      %v1298 = vadd.f32 %v1082, %v1297
      %v1299 = vpop.f32.mrf.mxu0
      %1300 = vmatprep.mubr.bf16.mxu0 0
      %1301 = vmatmul.mubr.bf16.gmra.mxu0 %v1046
      %v1302 = vpop.f32.mrf.mxu0
      %v1303 = vadd.f32 %v1082, %v1302
      %v1304 = vpop.f32.mrf.mxu0
      %v1305 = vpop.f32.mrf.mxu0
      %v1306 = vadd.f32 %v1082, %v1305
      %v1307 = vpop.f32.mrf.mxu0
      %1308 = vmatprep.mubr.bf16.mxu0 0
      %1309 = vmatmul.mubr.bf16.gmra.mxu0 %v1047
      %v1310 = vpop.f32.mrf.mxu0
      %v1311 = vadd.f32 %v1082, %v1310
      %v1312 = vpop.f32.mrf.mxu0
      %v1313 = vpop.f32.mrf.mxu0
      %v1314 = vadd.f32 %v1082, %v1313
      %v1315 = vpop.f32.mrf.mxu0
      %1316 = vmatprep.mubr.bf16.mxu0 0
      %1317 = vmatmul.mubr.bf16.gmra.mxu0 %v1048
      %v1318 = vpop.f32.mrf.mxu0
      %v1319 = vadd.f32 %v1082, %v1318
      %v1320 = vpop.f32.mrf.mxu0
      %v1321 = vpop.f32.mrf.mxu0
      %v1322 = vadd.f32 %v1082, %v1321
      %v1323 = vpop.f32.mrf.mxu0
      %1324 = vmatprep.mubr.bf16.mxu0 0
      %1325 = vmatmul.mubr.bf16.gmra.mxu0 %v1049
      %v1326 = vpop.f32.mrf.mxu0
      %v1327 = vadd.f32 %v1082, %v1326
      %v1328 = vpop.f32.mrf.mxu0
      %v1329 = vpop.f32.mrf.mxu0
      %v1330 = vadd.f32 %v1082, %v1329
      %v1331 = vpop.f32.mrf.mxu0
      %1332 = vmatprep.mubr.bf16.mxu0 0
      %1333 = vmatmul.mubr.bf16.gmra.mxu0 %v1050
      %v1334 = vpop.f32.mrf.mxu0
      %v1335 = vadd.f32 %v1082, %v1334
      %v1336 = vpop.f32.mrf.mxu0
      %v1337 = vpop.f32.mrf.mxu0
      %v1338 = vadd.f32 %v1082, %v1337
      %v1339 = vpop.f32.mrf.mxu0
      %1340 = vmatprep.mubr.bf16.mxu0 0
      %1341 = vmatmul.mubr.bf16.gmra.mxu0 %v1051
      %v1342 = vpop.f32.mrf.mxu0
      %v1343 = vadd.f32 %v1082, %v1342
      %v1344 = vpop.f32.mrf.mxu0
      %v1345 = vpop.f32.mrf.mxu0
      %v1346 = vadd.f32 %v1082, %v1345
      %v1347 = vpop.f32.mrf.mxu0
      %1348 = vmatprep.mubr.bf16.mxu0 0
      %1349 = vmatmul.mubr.bf16.gmra.mxu0 %v1052
      %v1350 = vpop.f32.mrf.mxu0
      %v1351 = vadd.f32 %v1082, %v1350
      %v1352 = vpop.f32.mrf.mxu0
      %v1353 = vpop.f32.mrf.mxu0
      %v1354 = vadd.f32 %v1082, %v1353
      %v1355 = vpop.f32.mrf.mxu0
      %1356 = vmatprep.mubr.bf16.mxu0 0
      %1357 = vmatmul.mubr.bf16.gmra.mxu0 %v1053
      %v1358 = vpop.f32.mrf.mxu0
      %v1359 = vadd.f32 %v1082, %v1358
      %v1360 = vpop.f32.mrf.mxu0
      %v1361 = vpop.f32.mrf.mxu0
      %v1362 = vadd.f32 %v1082, %v1361
      %v1363 = vpop.f32.mrf.mxu0
      %1364 = vmatprep.mubr.bf16.mxu0 0
      %1365 = vmatmul.mubr.bf16.gmra.mxu0 %v1054
      %v1366 = vpop.f32.mrf.mxu0
      %v1367 = vadd.f32 %v1082, %v1366
      %v1368 = vpop.f32.mrf.mxu0
      %v1369 = vpop.f32.mrf.mxu0
      %v1370 = vadd.f32 %v1082, %v1369
      %v1371 = vpop.f32.mrf.mxu0
      %1372 = vmatprep.mubr.bf16.mxu0 0
      %1373 = vmatmul.mubr.bf16.gmra.mxu0 %v1055
      %v1374 = vpop.f32.mrf.mxu0
      %v1375 = vadd.f32 %v1082, %v1374
      %v1376 = vpop.f32.mrf.mxu0
      %v1377 = vpop.f32.mrf.mxu0
      %v1378 = vadd.f32 %v1082, %v1377
      %v1379 = vpop.f32.mrf.mxu0
      %1380 = vmatprep.mubr.bf16.mxu0 0
      %1381 = vmatmul.mubr.bf16.gmra.mxu0 %v1056
      %v1382 = vpop.f32.mrf.mxu0
      %v1383 = vadd.f32 %v1082, %v1382
      %v1384 = vpop.f32.mrf.mxu0
      %v1385 = vpop.f32.mrf.mxu0
      %v1386 = vadd.f32 %v1082, %v1385
      %v1387 = vpop.f32.mrf.mxu0
      %1388 = vmatprep.mubr.bf16.mxu0 0
      %1389 = vmatmul.mubr.bf16.gmra.mxu0 %v1057
      %v1390 = vpop.f32.mrf.mxu0
      %v1391 = vadd.f32 %v1082, %v1390
      %v1392 = vpop.f32.mrf.mxu0
      %v1393 = vpop.f32.mrf.mxu0
      %v1394 = vadd.f32 %v1082, %v1393
      %v1395 = vpop.f32.mrf.mxu0
      %1396 = vmatprep.mubr.bf16.mxu0 0
      %1397 = vmatmul.mubr.bf16.gmra.mxu0 %v1058
      %v1398 = vpop.f32.mrf.mxu0
      %v1399 = vadd.f32 %v1082, %v1398
      %v1400 = vpop.f32.mrf.mxu0
      %v1401 = vpop.f32.mrf.mxu0
      %v1402 = vadd.f32 %v1082, %v1401
      %v1403 = vpop.f32.mrf.mxu0
      %1404 = vmatprep.mubr.bf16.mxu0 0
      %1405 = vmatmul.mubr.bf16.gmra.mxu0 %v1059
      %v1406 = vpop.f32.mrf.mxu0
      %v1407 = vadd.f32 %v1082, %v1406
      %v1408 = vpop.f32.mrf.mxu0
      %v1409 = vpop.f32.mrf.mxu0
      %v1410 = vadd.f32 %v1082, %v1409
      %v1411 = vpop.f32.mrf.mxu0
      %1412 = vmatprep.mubr.bf16.mxu0 0
      %1413 = vmatmul.mubr.bf16.gmra.mxu0 %v1060
      %v1414 = vpop.f32.mrf.mxu0
      %v1415 = vadd.f32 %v1082, %v1414
      %v1416 = vpop.f32.mrf.mxu0
      %v1417 = vpop.f32.mrf.mxu0
      %v1418 = vadd.f32 %v1082, %v1417
      %v1419 = vpop.f32.mrf.mxu0
      %1420 = vdwg.mxu0
      %v1421 = vtanh.pop %v1167
      %v1422 = vtanh.pop %v1170
      %v1423 = vtanh.pop %v1175
      %v1424 = vtanh.pop %v1178
      %v1425 = vtanh.pop %v1183
      %v1426 = vtanh.pop %v1186
      %v1427 = vtanh.pop %v1191
      %v1428 = vtanh.pop %v1194
      %v1429 = vtanh.pop %v1199
      %v1430 = vtanh.pop %v1202
      %v1431 = vtanh.pop %v1207
      %v1432 = vtanh.pop %v1210
      %v1433 = vtanh.pop %v1215
      %v1434 = vtanh.pop %v1218
      %v1435 = vtanh.pop %v1223
      %v1436 = vtanh.pop %v1226
      %v1437 = vtanh.pop %v1231
      %v1438 = vtanh.pop %v1234
      %v1439 = vtanh.pop %v1239
      %v1440 = vtanh.pop %v1242
      %v1441 = vtanh.pop %v1247
      %v1442 = vtanh.pop %v1250
      %v1443 = vtanh.pop %v1255
      %v1444 = vtanh.pop %v1258
      %v1445 = vtanh.pop %v1263
      %v1446 = vtanh.pop %v1266
      %v1447 = vtanh.pop %v1271
      %v1448 = vtanh.pop %v1274
      %v1449 = vtanh.pop %v1279
      %v1450 = vtanh.pop %v1282
      %v1451 = vtanh.pop %v1287
      %v1452 = vtanh.pop %v1290
      %v1453 = vtanh.pop %v1295
      %v1454 = vtanh.pop %v1298
      %v1455 = vtanh.pop %v1303
      %v1456 = vtanh.pop %v1306
      %v1457 = vtanh.pop %v1311
      %v1458 = vtanh.pop %v1314
      %v1459 = vtanh.pop %v1319
      %v1460 = vtanh.pop %v1322
      %v1461 = vtanh.pop %v1327
      %v1462 = vtanh.pop %v1330
      %v1463 = vtanh.pop %v1335
      %v1464 = vtanh.pop %v1338
      %v1465 = vtanh.pop %v1343
      %v1466 = vtanh.pop %v1346
      %v1467 = vtanh.pop %v1351
      %v1468 = vtanh.pop %v1354
      %v1469 = vtanh.pop %v1359
      %v1470 = vtanh.pop %v1362
      %v1471 = vtanh.pop %v1367
      %v1472 = vtanh.pop %v1370
      %v1473 = vtanh.pop %v1375
      %v1474 = vtanh.pop %v1378
      %v1475 = vtanh.pop %v1383
      %v1476 = vtanh.pop %v1386
      %v1477 = vtanh.pop %v1391
      %v1478 = vtanh.pop %v1394
      %v1479 = vtanh.pop %v1399
      %v1480 = vtanh.pop %v1402
      %v1481 = vtanh.pop %v1407
      %v1482 = vtanh.pop %v1410
      %v1483 = vtanh.pop %v1415
      %v1484 = vtanh.pop %v1418
      %v1485 = vld [vmem:[%s323] sm:$0xff]
      %v1486 = vld [vmem:[%s323 + $0x8] sm:$0xff]
      %v1487 = vld [vmem:[%s323 + $0x10] sm:$0xff]
      %v1488 = vld [vmem:[%s323 + $0x18] sm:$0xff]
      %v1489 = vld [vmem:[%s323 + $0x20] sm:$0xff]
      %v1490 = vld [vmem:[%s323 + $0x28] sm:$0xff]
      %v1491 = vld [vmem:[%s323 + $0x30] sm:$0xff]
      %v1492 = vld [vmem:[%s323 + $0x38] sm:$0xff]
      %v1493 = vld [vmem:[%s323 + $0x40] sm:$0xff]
      %v1494 = vld [vmem:[%s323 + $0x48] sm:$0xff]
      %v1495 = vld [vmem:[%s323 + $0x50] sm:$0xff]
      %v1496 = vld [vmem:[%s323 + $0x58] sm:$0xff]
      %v1497 = vld [vmem:[%s323 + $0x60] sm:$0xff]
      %v1498 = vld [vmem:[%s323 + $0x68] sm:$0xff]
      %v1499 = vld [vmem:[%s323 + $0x70] sm:$0xff]
      %v1500 = vld [vmem:[%s323 + $0x78] sm:$0xff]
      %v1501 = vld [vmem:[%s323 + $0x80] sm:$0xff]
      %v1502 = vld [vmem:[%s323 + $0x88] sm:$0xff]
      %v1503 = vld [vmem:[%s323 + $0x90] sm:$0xff]
      %v1504 = vld [vmem:[%s323 + $0x98] sm:$0xff]
      %v1505 = vld [vmem:[%s323 + $0xa0] sm:$0xff]
      %v1506 = vld [vmem:[%s323 + $0xa8] sm:$0xff]
      %v1507 = vld [vmem:[%s323 + $0xb0] sm:$0xff]
      %v1508 = vld [vmem:[%s323 + $0xb8] sm:$0xff]
      %v1509 = vld [vmem:[%s323 + $0xc0] sm:$0xff]
      %v1510 = vld [vmem:[%s323 + $0xc8] sm:$0xff]
      %v1511 = vld [vmem:[%s323 + $0xd0] sm:$0xff]
      %v1512 = vld [vmem:[%s323 + $0xd8] sm:$0xff]
      %v1513 = vld [vmem:[%s323 + $0xe0] sm:$0xff]
      %v1514 = vld [vmem:[%s323 + $0xe8] sm:$0xff]
      %v1515 = vld [vmem:[%s323 + $0xf0] sm:$0xff]
      %v1516 = vld [vmem:[%s323 + $0xf8] sm:$0xff]
      %v1517 = vld [vmem:[%s323 + $0x100] sm:$0xff]
      %v1518 = vld [vmem:[%s323 + $0x108] sm:$0xff]
      %v1519 = vld [vmem:[%s323 + $0x110] sm:$0xff]
      %v1520 = vld [vmem:[%s323 + $0x118] sm:$0xff]
      %v1521 = vld [vmem:[%s323 + $0x120] sm:$0xff]
      %v1522 = vld [vmem:[%s323 + $0x128] sm:$0xff]
      %v1523 = vld [vmem:[%s323 + $0x130] sm:$0xff]
      %v1524 = vld [vmem:[%s323 + $0x138] sm:$0xff]
      %v1525 = vld [vmem:[%s323 + $0x140] sm:$0xff]
      %v1526 = vld [vmem:[%s323 + $0x148] sm:$0xff]
      %v1527 = vld [vmem:[%s323 + $0x150] sm:$0xff]
      %v1528 = vld [vmem:[%s323 + $0x158] sm:$0xff]
      %v1529 = vld [vmem:[%s323 + $0x160] sm:$0xff]
      %v1530 = vld [vmem:[%s323 + $0x168] sm:$0xff]
      %v1531 = vld [vmem:[%s323 + $0x170] sm:$0xff]
      %v1532 = vld [vmem:[%s323 + $0x178] sm:$0xff]
      %v1533 = vld [vmem:[%s323 + $0x180] sm:$0xff]
      %v1534 = vld [vmem:[%s323 + $0x188] sm:$0xff]
      %v1535 = vld [vmem:[%s323 + $0x190] sm:$0xff]
      %v1536 = vld [vmem:[%s323 + $0x198] sm:$0xff]
      %v1537 = vld [vmem:[%s323 + $0x1a0] sm:$0xff]
      %v1538 = vld [vmem:[%s323 + $0x1a8] sm:$0xff]
      %v1539 = vld [vmem:[%s323 + $0x1b0] sm:$0xff]
      %v1540 = vld [vmem:[%s323 + $0x1b8] sm:$0xff]
      %v1541 = vld [vmem:[%s323 + $0x1c0] sm:$0xff]
      %v1542 = vld [vmem:[%s323 + $0x1c8] sm:$0xff]
      %v1543 = vld [vmem:[%s323 + $0x1d0] sm:$0xff]
      %v1544 = vld [vmem:[%s323 + $0x1d8] sm:$0xff]
      %v1545 = vld [vmem:[%s323 + $0x1e0] sm:$0xff]
      %v1546 = vld [vmem:[%s323 + $0x1e8] sm:$0xff]
      %v1547 = vld [vmem:[%s323 + $0x1f0] sm:$0xff]
      %v1548 = vld [vmem:[%s323 + $0x1f8] sm:$0xff]
      %v1549 = vld [vmem:[%s6] sm:$0xf]
      %vm1550 = vcmask 31744
      %v1552 = vsel %vm1550, %v1485, 0
      %v1555 = vsel %vm1550, %v1486, 0
      %v1558 = vsel %vm1550, %v1487, 0
      %v1561 = vsel %vm1550, %v1488, 0
      %v1564 = vsel %vm1550, %v1489, 0
      %v1567 = vsel %vm1550, %v1490, 0
      %v1570 = vsel %vm1550, %v1491, 0
      %v1573 = vsel %vm1550, %v1492, 0
      %v1576 = vsel %vm1550, %v1493, 0
      %v1579 = vsel %vm1550, %v1494, 0
      %v1582 = vsel %vm1550, %v1495, 0
      %v1585 = vsel %vm1550, %v1496, 0
      %v1588 = vsel %vm1550, %v1497, 0
      %v1591 = vsel %vm1550, %v1498, 0
      %v1594 = vsel %vm1550, %v1499, 0
      %v1597 = vsel %vm1550, %v1500, 0
      %v1600 = vsel %vm1550, %v1501, 0
      %v1603 = vsel %vm1550, %v1502, 0
      %v1606 = vsel %vm1550, %v1503, 0
      %v1609 = vsel %vm1550, %v1504, 0
      %v1612 = vsel %vm1550, %v1505, 0
      %v1615 = vsel %vm1550, %v1506, 0
      %v1618 = vsel %vm1550, %v1507, 0
      %v1621 = vsel %vm1550, %v1508, 0
      %v1624 = vsel %vm1550, %v1509, 0
      %v1627 = vsel %vm1550, %v1510, 0
      %v1630 = vsel %vm1550, %v1511, 0
      %v1633 = vsel %vm1550, %v1512, 0
      %v1636 = vsel %vm1550, %v1513, 0
      %v1639 = vsel %vm1550, %v1514, 0
      %v1642 = vsel %vm1550, %v1515, 0
      %v1645 = vsel %vm1550, %v1516, 0
      %v1648 = vsel %vm1550, %v1517, 0
      %v1651 = vsel %vm1550, %v1518, 0
      %v1654 = vsel %vm1550, %v1519, 0
      %v1657 = vsel %vm1550, %v1520, 0
      %v1660 = vsel %vm1550, %v1521, 0
      %v1663 = vsel %vm1550, %v1522, 0
      %v1666 = vsel %vm1550, %v1523, 0
      %v1669 = vsel %vm1550, %v1524, 0
      %v1672 = vsel %vm1550, %v1525, 0
      %v1675 = vsel %vm1550, %v1526, 0
      %v1678 = vsel %vm1550, %v1527, 0
      %v1681 = vsel %vm1550, %v1528, 0
      %v1684 = vsel %vm1550, %v1529, 0
      %v1687 = vsel %vm1550, %v1530, 0
      %v1690 = vsel %vm1550, %v1531, 0
      %v1693 = vsel %vm1550, %v1532, 0
      %v1696 = vsel %vm1550, %v1533, 0
      %v1699 = vsel %vm1550, %v1534, 0
      %v1702 = vsel %vm1550, %v1535, 0
      %v1705 = vsel %vm1550, %v1536, 0
      %v1708 = vsel %vm1550, %v1537, 0
      %v1711 = vsel %vm1550, %v1538, 0
      %v1714 = vsel %vm1550, %v1539, 0
      %v1717 = vsel %vm1550, %v1540, 0
      %v1720 = vsel %vm1550, %v1541, 0
      %v1723 = vsel %vm1550, %v1542, 0
      %v1726 = vsel %vm1550, %v1543, 0
      %v1729 = vsel %vm1550, %v1544, 0
      %v1732 = vsel %vm1550, %v1545, 0
      %v1735 = vsel %vm1550, %v1546, 0
      %v1738 = vsel %vm1550, %v1547, 0
      %v1741 = vsel %vm1550, %v1548, 0
      %vm1743 = vcmask 1043456
      %v1745 = vsel %vm1743, %v1549, 0
      %1747 = vmatprep.subr.mxu0 0.0
      %1748 = vmatpush1.msra.mxu0 0.0
      %1749 = vmatprep.subr.mxu0 0.0
      %1750 = vmatpush1.msra.mxu0 0.0
      %1751 = vmatprep.subr.mxu0 0.0
      %1752 = vmatpush1.msra.mxu0 0.0
      %1753 = vmatprep.subr.mxu0 0.0
      %1754 = vmatpush1.msra.mxu0 0.0
      %1755 = vmatprep.subr.mxu0 0.0
      %1756 = vmatpush1.msra.mxu0 0.0
      %1757 = vmatprep.subr.mxu0 0.0
      %1758 = vmatpush1.msra.mxu0 0.0
      %1759 = vmatprep.subr.mxu0 0.0
      %1760 = vmatpush1.msra.mxu0 0.0
      %1761 = vmatprep.subr.mxu0 0.0
      %1762 = vmatpush1.msra.mxu0 0.0
      %1763 = vmatprep.subr.mxu0 0.0
      %1764 = vmatpush1.msra.mxu0 0.0
      %1765 = vmatprep.subr.mxu0 0.0
      %1766 = vmatpush1.msra.mxu0 0.0
      %1767 = vmatprep.subr.mxu0 0.0
      %1768 = vmatpush1.msra.mxu0 0.0
      %1769 = vmatprep.subr.mxu0 0.0
      %1770 = vmatpush1.msra.mxu0 0.0
      %1771 = vmatprep.subr.mxu0 0.0
      %1772 = vmatpush1.msra.mxu0 0.0
      %1773 = vmatprep.subr.mxu0 0.0
      %1774 = vmatpush1.msra.mxu0 0.0
      %1775 = vmatprep.subr.mxu0 0.0
      %1776 = vmatpush1.msra.mxu0 0.0
      %1777 = vmatprep.subr.mxu0 0.0
      %1778 = vmatpush1.msra.mxu0 %v1745
      %1779 = vmatprep.subr.mxu0 0.0
      %1780 = vmatpush2.msra.mxu0 0.0
      %1781 = vmatprep.subr.mxu0 0.0
      %1782 = vmatpush2.msra.mxu0 0.0
      %1783 = vmatprep.subr.mxu0 0.0
      %1784 = vmatpush2.msra.mxu0 0.0
      %1785 = vmatprep.subr.mxu0 0.0
      %1786 = vmatpush2.msra.mxu0 0.0
      %1787 = vmatprep.subr.mxu0 0.0
      %1788 = vmatpush2.msra.mxu0 0.0
      %1789 = vmatprep.subr.mxu0 0.0
      %1790 = vmatpush2.msra.mxu0 0.0
      %1791 = vmatprep.subr.mxu0 0.0
      %1792 = vmatpush2.msra.mxu0 0.0
      %1793 = vmatprep.subr.mxu0 0.0
      %1794 = vmatpush2.msra.mxu0 0.0
      %1795 = vmatprep.subr.mxu0 0.0
      %1796 = vmatpush2.msra.mxu0 0.0
      %1797 = vmatprep.subr.mxu0 0.0
      %1798 = vmatpush2.msra.mxu0 0.0
      %1799 = vmatprep.subr.mxu0 0.0
      %1800 = vmatpush2.msra.mxu0 0.0
      %1801 = vmatprep.subr.mxu0 0.0
      %1802 = vmatpush2.msra.mxu0 0.0
      %1803 = vmatprep.subr.mxu0 0.0
      %1804 = vmatpush2.msra.mxu0 0.0
      %1805 = vmatprep.subr.mxu0 0.0
      %1806 = vmatpush2.msra.mxu0 0.0
      %1807 = vmatprep.subr.mxu0 0.0
      %1808 = vmatpush2.msra.mxu0 0.0
      %1809 = vmatprep.subr.mxu0 0.0
      %1810 = vmatpush2.msra.mxu0 0.0
      %1811 = vmatprep.mubr.f32.mxu0 0.0
      %1812 = vmatmul.mubr.f32.gmra.mxu0 %v1552
      %v1813 = vpop.f32.mrf.mxu0
      %v1814 = vadd.f32 0.0, %v1813
      %v1815 = vpop.f32.mrf.mxu0
      %1816 = vmatprep.mubr.f32.mxu0 0.0
      %1817 = vmatmul.mubr.f32.gmra.mxu0 %v1555
      %v1818 = vpop.f32.mrf.mxu0
      %v1819 = vadd.f32 0.0, %v1818
      %v1820 = vpop.f32.mrf.mxu0
      %1821 = vmatprep.mubr.f32.mxu0 0.0
      %1822 = vmatmul.mubr.f32.gmra.mxu0 %v1558
      %v1823 = vpop.f32.mrf.mxu0
      %v1824 = vadd.f32 0.0, %v1823
      %v1825 = vpop.f32.mrf.mxu0
      %1826 = vmatprep.mubr.f32.mxu0 0.0
      %1827 = vmatmul.mubr.f32.gmra.mxu0 %v1561
      %v1828 = vpop.f32.mrf.mxu0
      %v1829 = vadd.f32 0.0, %v1828
      %v1830 = vpop.f32.mrf.mxu0
      %1831 = vmatprep.mubr.f32.mxu0 0.0
      %1832 = vmatmul.mubr.f32.gmra.mxu0 %v1564
      %v1833 = vpop.f32.mrf.mxu0
      %v1834 = vadd.f32 0.0, %v1833
      %v1835 = vpop.f32.mrf.mxu0
      %1836 = vmatprep.mubr.f32.mxu0 0.0
      %1837 = vmatmul.mubr.f32.gmra.mxu0 %v1567
      %v1838 = vpop.f32.mrf.mxu0
      %v1839 = vadd.f32 0.0, %v1838
      %v1840 = vpop.f32.mrf.mxu0
      %1841 = vmatprep.mubr.f32.mxu0 0.0
      %1842 = vmatmul.mubr.f32.gmra.mxu0 %v1570
      %v1843 = vpop.f32.mrf.mxu0
      %v1844 = vadd.f32 0.0, %v1843
      %v1845 = vpop.f32.mrf.mxu0
      %1846 = vmatprep.mubr.f32.mxu0 0.0
      %1847 = vmatmul.mubr.f32.gmra.mxu0 %v1573
      %v1848 = vpop.f32.mrf.mxu0
      %v1849 = vadd.f32 0.0, %v1848
      %v1850 = vpop.f32.mrf.mxu0
      %1851 = vmatprep.mubr.f32.mxu0 0.0
      %1852 = vmatmul.mubr.f32.gmra.mxu0 %v1576
      %v1853 = vpop.f32.mrf.mxu0
      %v1854 = vadd.f32 0.0, %v1853
      %v1855 = vpop.f32.mrf.mxu0
      %1856 = vmatprep.mubr.f32.mxu0 0.0
      %1857 = vmatmul.mubr.f32.gmra.mxu0 %v1579
      %v1858 = vpop.f32.mrf.mxu0
      %v1859 = vadd.f32 0.0, %v1858
      %v1860 = vpop.f32.mrf.mxu0
      %1861 = vmatprep.mubr.f32.mxu0 0.0
      %1862 = vmatmul.mubr.f32.gmra.mxu0 %v1582
      %v1863 = vpop.f32.mrf.mxu0
      %v1864 = vadd.f32 0.0, %v1863
      %v1865 = vpop.f32.mrf.mxu0
      %1866 = vmatprep.mubr.f32.mxu0 0.0
      %1867 = vmatmul.mubr.f32.gmra.mxu0 %v1585
      %v1868 = vpop.f32.mrf.mxu0
      %v1869 = vadd.f32 0.0, %v1868
      %v1870 = vpop.f32.mrf.mxu0
      %1871 = vmatprep.mubr.f32.mxu0 0.0
      %1872 = vmatmul.mubr.f32.gmra.mxu0 %v1588
      %v1873 = vpop.f32.mrf.mxu0
      %v1874 = vadd.f32 0.0, %v1873
      %v1875 = vpop.f32.mrf.mxu0
      %1876 = vmatprep.mubr.f32.mxu0 0.0
      %1877 = vmatmul.mubr.f32.gmra.mxu0 %v1591
      %v1878 = vpop.f32.mrf.mxu0
      %v1879 = vadd.f32 0.0, %v1878
      %v1880 = vpop.f32.mrf.mxu0
      %1881 = vmatprep.mubr.f32.mxu0 0.0
      %1882 = vmatmul.mubr.f32.gmra.mxu0 %v1594
      %v1883 = vpop.f32.mrf.mxu0
      %v1884 = vadd.f32 0.0, %v1883
      %v1885 = vpop.f32.mrf.mxu0
      %1886 = vmatprep.mubr.f32.mxu0 0.0
      %1887 = vmatmul.mubr.f32.gmra.mxu0 %v1597
      %v1888 = vpop.f32.mrf.mxu0
      %v1889 = vadd.f32 0.0, %v1888
      %v1890 = vpop.f32.mrf.mxu0
      %1891 = vmatprep.mubr.f32.mxu0 0.0
      %1892 = vmatmul.mubr.f32.gmra.mxu0 %v1600
      %v1893 = vpop.f32.mrf.mxu0
      %v1894 = vadd.f32 0.0, %v1893
      %v1895 = vpop.f32.mrf.mxu0
      %1896 = vmatprep.mubr.f32.mxu0 0.0
      %1897 = vmatmul.mubr.f32.gmra.mxu0 %v1603
      %v1898 = vpop.f32.mrf.mxu0
      %v1899 = vadd.f32 0.0, %v1898
      %v1900 = vpop.f32.mrf.mxu0
      %1901 = vmatprep.mubr.f32.mxu0 0.0
      %1902 = vmatmul.mubr.f32.gmra.mxu0 %v1606
      %v1903 = vpop.f32.mrf.mxu0
      %v1904 = vadd.f32 0.0, %v1903
      %v1905 = vpop.f32.mrf.mxu0
      %1906 = vmatprep.mubr.f32.mxu0 0.0
      %1907 = vmatmul.mubr.f32.gmra.mxu0 %v1609
      %v1908 = vpop.f32.mrf.mxu0
      %v1909 = vadd.f32 0.0, %v1908
      %v1910 = vpop.f32.mrf.mxu0
      %1911 = vmatprep.mubr.f32.mxu0 0.0
      %1912 = vmatmul.mubr.f32.gmra.mxu0 %v1612
      %v1913 = vpop.f32.mrf.mxu0
      %v1914 = vadd.f32 0.0, %v1913
      %v1915 = vpop.f32.mrf.mxu0
      %1916 = vmatprep.mubr.f32.mxu0 0.0
      %1917 = vmatmul.mubr.f32.gmra.mxu0 %v1615
      %v1918 = vpop.f32.mrf.mxu0
      %v1919 = vadd.f32 0.0, %v1918
      %v1920 = vpop.f32.mrf.mxu0
      %1921 = vmatprep.mubr.f32.mxu0 0.0
      %1922 = vmatmul.mubr.f32.gmra.mxu0 %v1618
      %v1923 = vpop.f32.mrf.mxu0
      %v1924 = vadd.f32 0.0, %v1923
      %v1925 = vpop.f32.mrf.mxu0
      %1926 = vmatprep.mubr.f32.mxu0 0.0
      %1927 = vmatmul.mubr.f32.gmra.mxu0 %v1621
      %v1928 = vpop.f32.mrf.mxu0
      %v1929 = vadd.f32 0.0, %v1928
      %v1930 = vpop.f32.mrf.mxu0
      %1931 = vmatprep.mubr.f32.mxu0 0.0
      %1932 = vmatmul.mubr.f32.gmra.mxu0 %v1624
      %v1933 = vpop.f32.mrf.mxu0
      %v1934 = vadd.f32 0.0, %v1933
      %v1935 = vpop.f32.mrf.mxu0
      %1936 = vmatprep.mubr.f32.mxu0 0.0
      %1937 = vmatmul.mubr.f32.gmra.mxu0 %v1627
      %v1938 = vpop.f32.mrf.mxu0
      %v1939 = vadd.f32 0.0, %v1938
      %v1940 = vpop.f32.mrf.mxu0
      %1941 = vmatprep.mubr.f32.mxu0 0.0
      %1942 = vmatmul.mubr.f32.gmra.mxu0 %v1630
      %v1943 = vpop.f32.mrf.mxu0
      %v1944 = vadd.f32 0.0, %v1943
      %v1945 = vpop.f32.mrf.mxu0
      %1946 = vmatprep.mubr.f32.mxu0 0.0
      %1947 = vmatmul.mubr.f32.gmra.mxu0 %v1633
      %v1948 = vpop.f32.mrf.mxu0
      %v1949 = vadd.f32 0.0, %v1948
      %v1950 = vpop.f32.mrf.mxu0
      %1951 = vmatprep.mubr.f32.mxu0 0.0
      %1952 = vmatmul.mubr.f32.gmra.mxu0 %v1636
      %v1953 = vpop.f32.mrf.mxu0
      %v1954 = vadd.f32 0.0, %v1953
      %v1955 = vpop.f32.mrf.mxu0
      %1956 = vmatprep.mubr.f32.mxu0 0.0
      %1957 = vmatmul.mubr.f32.gmra.mxu0 %v1639
      %v1958 = vpop.f32.mrf.mxu0
      %v1959 = vadd.f32 0.0, %v1958
      %v1960 = vpop.f32.mrf.mxu0
      %1961 = vmatprep.mubr.f32.mxu0 0.0
      %1962 = vmatmul.mubr.f32.gmra.mxu0 %v1642
      %v1963 = vpop.f32.mrf.mxu0
      %v1964 = vadd.f32 0.0, %v1963
      %v1965 = vpop.f32.mrf.mxu0
      %1966 = vmatprep.mubr.f32.mxu0 0.0
      %1967 = vmatmul.mubr.f32.gmra.mxu0 %v1645
      %v1968 = vpop.f32.mrf.mxu0
      %v1969 = vadd.f32 0.0, %v1968
      %v1970 = vpop.f32.mrf.mxu0
      %1971 = vmatprep.mubr.f32.mxu0 0.0
      %1972 = vmatmul.mubr.f32.gmra.mxu0 %v1648
      %v1973 = vpop.f32.mrf.mxu0
      %v1974 = vadd.f32 0.0, %v1973
      %v1975 = vpop.f32.mrf.mxu0
      %1976 = vmatprep.mubr.f32.mxu0 0.0
      %1977 = vmatmul.mubr.f32.gmra.mxu0 %v1651
      %v1978 = vpop.f32.mrf.mxu0
      %v1979 = vadd.f32 0.0, %v1978
      %v1980 = vpop.f32.mrf.mxu0
      %1981 = vmatprep.mubr.f32.mxu0 0.0
      %1982 = vmatmul.mubr.f32.gmra.mxu0 %v1654
      %v1983 = vpop.f32.mrf.mxu0
      %v1984 = vadd.f32 0.0, %v1983
      %v1985 = vpop.f32.mrf.mxu0
      %1986 = vmatprep.mubr.f32.mxu0 0.0
      %1987 = vmatmul.mubr.f32.gmra.mxu0 %v1657
      %v1988 = vpop.f32.mrf.mxu0
      %v1989 = vadd.f32 0.0, %v1988
      %v1990 = vpop.f32.mrf.mxu0
      %1991 = vmatprep.mubr.f32.mxu0 0.0
      %1992 = vmatmul.mubr.f32.gmra.mxu0 %v1660
      %v1993 = vpop.f32.mrf.mxu0
      %v1994 = vadd.f32 0.0, %v1993
      %v1995 = vpop.f32.mrf.mxu0
      %1996 = vmatprep.mubr.f32.mxu0 0.0
      %1997 = vmatmul.mubr.f32.gmra.mxu0 %v1663
      %v1998 = vpop.f32.mrf.mxu0
      %v1999 = vadd.f32 0.0, %v1998
      %v2000 = vpop.f32.mrf.mxu0
      %2001 = vmatprep.mubr.f32.mxu0 0.0
      %2002 = vmatmul.mubr.f32.gmra.mxu0 %v1666
      %v2003 = vpop.f32.mrf.mxu0
      %v2004 = vadd.f32 0.0, %v2003
      %v2005 = vpop.f32.mrf.mxu0
      %2006 = vmatprep.mubr.f32.mxu0 0.0
      %2007 = vmatmul.mubr.f32.gmra.mxu0 %v1669
      %v2008 = vpop.f32.mrf.mxu0
      %v2009 = vadd.f32 0.0, %v2008
      %v2010 = vpop.f32.mrf.mxu0
      %2011 = vmatprep.mubr.f32.mxu0 0.0
      %2012 = vmatmul.mubr.f32.gmra.mxu0 %v1672
      %v2013 = vpop.f32.mrf.mxu0
      %v2014 = vadd.f32 0.0, %v2013
      %v2015 = vpop.f32.mrf.mxu0
      %2016 = vmatprep.mubr.f32.mxu0 0.0
      %2017 = vmatmul.mubr.f32.gmra.mxu0 %v1675
      %v2018 = vpop.f32.mrf.mxu0
      %v2019 = vadd.f32 0.0, %v2018
      %v2020 = vpop.f32.mrf.mxu0
      %2021 = vmatprep.mubr.f32.mxu0 0.0
      %2022 = vmatmul.mubr.f32.gmra.mxu0 %v1678
      %v2023 = vpop.f32.mrf.mxu0
      %v2024 = vadd.f32 0.0, %v2023
      %v2025 = vpop.f32.mrf.mxu0
      %2026 = vmatprep.mubr.f32.mxu0 0.0
      %2027 = vmatmul.mubr.f32.gmra.mxu0 %v1681
      %v2028 = vpop.f32.mrf.mxu0
      %v2029 = vadd.f32 0.0, %v2028
      %v2030 = vpop.f32.mrf.mxu0
      %2031 = vmatprep.mubr.f32.mxu0 0.0
      %2032 = vmatmul.mubr.f32.gmra.mxu0 %v1684
      %v2033 = vpop.f32.mrf.mxu0
      %v2034 = vadd.f32 0.0, %v2033
      %v2035 = vpop.f32.mrf.mxu0
      %2036 = vmatprep.mubr.f32.mxu0 0.0
      %2037 = vmatmul.mubr.f32.gmra.mxu0 %v1687
      %v2038 = vpop.f32.mrf.mxu0
      %v2039 = vadd.f32 0.0, %v2038
      %v2040 = vpop.f32.mrf.mxu0
      %2041 = vmatprep.mubr.f32.mxu0 0.0
      %2042 = vmatmul.mubr.f32.gmra.mxu0 %v1690
      %v2043 = vpop.f32.mrf.mxu0
      %v2044 = vadd.f32 0.0, %v2043
      %v2045 = vpop.f32.mrf.mxu0
      %2046 = vmatprep.mubr.f32.mxu0 0.0
      %2047 = vmatmul.mubr.f32.gmra.mxu0 %v1693
      %v2048 = vpop.f32.mrf.mxu0
      %v2049 = vadd.f32 0.0, %v2048
      %v2050 = vpop.f32.mrf.mxu0
      %2051 = vmatprep.mubr.f32.mxu0 0.0
      %2052 = vmatmul.mubr.f32.gmra.mxu0 %v1696
      %v2053 = vpop.f32.mrf.mxu0
      %v2054 = vadd.f32 0.0, %v2053
      %v2055 = vpop.f32.mrf.mxu0
      %2056 = vmatprep.mubr.f32.mxu0 0.0
      %2057 = vmatmul.mubr.f32.gmra.mxu0 %v1699
      %v2058 = vpop.f32.mrf.mxu0
      %v2059 = vadd.f32 0.0, %v2058
      %v2060 = vpop.f32.mrf.mxu0
      %2061 = vmatprep.mubr.f32.mxu0 0.0
      %2062 = vmatmul.mubr.f32.gmra.mxu0 %v1702
      %v2063 = vpop.f32.mrf.mxu0
      %v2064 = vadd.f32 0.0, %v2063
      %v2065 = vpop.f32.mrf.mxu0
      %2066 = vmatprep.mubr.f32.mxu0 0.0
      %2067 = vmatmul.mubr.f32.gmra.mxu0 %v1705
      %v2068 = vpop.f32.mrf.mxu0
      %v2069 = vadd.f32 0.0, %v2068
      %v2070 = vpop.f32.mrf.mxu0
      %2071 = vmatprep.mubr.f32.mxu0 0.0
      %2072 = vmatmul.mubr.f32.gmra.mxu0 %v1708
      %v2073 = vpop.f32.mrf.mxu0
      %v2074 = vadd.f32 0.0, %v2073
      %v2075 = vpop.f32.mrf.mxu0
      %2076 = vmatprep.mubr.f32.mxu0 0.0
      %2077 = vmatmul.mubr.f32.gmra.mxu0 %v1711
      %v2078 = vpop.f32.mrf.mxu0
      %v2079 = vadd.f32 0.0, %v2078
      %v2080 = vpop.f32.mrf.mxu0
      %2081 = vmatprep.mubr.f32.mxu0 0.0
      %2082 = vmatmul.mubr.f32.gmra.mxu0 %v1714
      %v2083 = vpop.f32.mrf.mxu0
      %v2084 = vadd.f32 0.0, %v2083
      %v2085 = vpop.f32.mrf.mxu0
      %2086 = vmatprep.mubr.f32.mxu0 0.0
      %2087 = vmatmul.mubr.f32.gmra.mxu0 %v1717
      %v2088 = vpop.f32.mrf.mxu0
      %v2089 = vadd.f32 0.0, %v2088
      %v2090 = vpop.f32.mrf.mxu0
      %2091 = vmatprep.mubr.f32.mxu0 0.0
      %2092 = vmatmul.mubr.f32.gmra.mxu0 %v1720
      %v2093 = vpop.f32.mrf.mxu0
      %v2094 = vadd.f32 0.0, %v2093
      %v2095 = vpop.f32.mrf.mxu0
      %2096 = vmatprep.mubr.f32.mxu0 0.0
      %2097 = vmatmul.mubr.f32.gmra.mxu0 %v1723
      %v2098 = vpop.f32.mrf.mxu0
      %v2099 = vadd.f32 0.0, %v2098
      %v2100 = vpop.f32.mrf.mxu0
      %2101 = vmatprep.mubr.f32.mxu0 0.0
      %2102 = vmatmul.mubr.f32.gmra.mxu0 %v1726
      %v2103 = vpop.f32.mrf.mxu0
      %v2104 = vadd.f32 0.0, %v2103
      %v2105 = vpop.f32.mrf.mxu0
      %2106 = vmatprep.mubr.f32.mxu0 0.0
      %2107 = vmatmul.mubr.f32.gmra.mxu0 %v1729
      %v2108 = vpop.f32.mrf.mxu0
      %v2109 = vadd.f32 0.0, %v2108
      %v2110 = vpop.f32.mrf.mxu0
      %2111 = vmatprep.mubr.f32.mxu0 0.0
      %2112 = vmatmul.mubr.f32.gmra.mxu0 %v1732
      %v2113 = vpop.f32.mrf.mxu0
      %v2114 = vadd.f32 0.0, %v2113
      %v2115 = vpop.f32.mrf.mxu0
      %2116 = vmatprep.mubr.f32.mxu0 0.0
      %2117 = vmatmul.mubr.f32.gmra.mxu0 %v1735
      %v2118 = vpop.f32.mrf.mxu0
      %v2119 = vadd.f32 0.0, %v2118
      %v2120 = vpop.f32.mrf.mxu0
      %2121 = vmatprep.mubr.f32.mxu0 0.0
      %2122 = vmatmul.mubr.f32.gmra.mxu0 %v1738
      %v2123 = vpop.f32.mrf.mxu0
      %v2124 = vadd.f32 0.0, %v2123
      %v2125 = vpop.f32.mrf.mxu0
      %2126 = vmatprep.mubr.f32.mxu0 0.0
      %2127 = vmatmul.mubr.f32.gmra.mxu0 %v1741
      %v2128 = vpop.f32.mrf.mxu0
      %v2129 = vadd.f32 0.0, %v2128
      %v2130 = vpop.f32.mrf.mxu0
      %2131 = vdwg.mxu0
      %v2132 = vmul.f32 %v1421, %v1814
      %v2133 = vmul.f32 %v1422, %v1819
      %v2134 = vmul.f32 %v1423, %v1824
      %v2135 = vmul.f32 %v1424, %v1829
      %v2136 = vmul.f32 %v1425, %v1834
      %v2137 = vmul.f32 %v1426, %v1839
      %v2138 = vmul.f32 %v1427, %v1844
      %v2139 = vmul.f32 %v1428, %v1849
      %v2140 = vmul.f32 %v1429, %v1854
      %v2141 = vmul.f32 %v1430, %v1859
      %v2142 = vmul.f32 %v1431, %v1864
      %v2143 = vmul.f32 %v1432, %v1869
      %v2144 = vmul.f32 %v1433, %v1874
      %v2145 = vmul.f32 %v1434, %v1879
      %v2146 = vmul.f32 %v1435, %v1884
      %v2147 = vmul.f32 %v1436, %v1889
      %v2148 = vmul.f32 %v1437, %v1894
      %v2149 = vmul.f32 %v1438, %v1899
      %v2150 = vmul.f32 %v1439, %v1904
      %v2151 = vmul.f32 %v1440, %v1909
      %v2152 = vmul.f32 %v1441, %v1914
      %v2153 = vmul.f32 %v1442, %v1919
      %v2154 = vmul.f32 %v1443, %v1924
      %v2155 = vmul.f32 %v1444, %v1929
      %v2156 = vmul.f32 %v1445, %v1934
      %v2157 = vmul.f32 %v1446, %v1939
      %v2158 = vmul.f32 %v1447, %v1944
      %v2159 = vmul.f32 %v1448, %v1949
      %v2160 = vmul.f32 %v1449, %v1954
      %v2161 = vmul.f32 %v1450, %v1959
      %v2162 = vmul.f32 %v1451, %v1964
      %v2163 = vmul.f32 %v1452, %v1969
      %v2164 = vmul.f32 %v1453, %v1974
      %v2165 = vmul.f32 %v1454, %v1979
      %v2166 = vmul.f32 %v1455, %v1984
      %v2167 = vmul.f32 %v1456, %v1989
      %v2168 = vmul.f32 %v1457, %v1994
      %v2169 = vmul.f32 %v1458, %v1999
      %v2170 = vmul.f32 %v1459, %v2004
      %v2171 = vmul.f32 %v1460, %v2009
      %v2172 = vmul.f32 %v1461, %v2014
      %v2173 = vmul.f32 %v1462, %v2019
      %v2174 = vmul.f32 %v1463, %v2024
      %v2175 = vmul.f32 %v1464, %v2029
      %v2176 = vmul.f32 %v1465, %v2034
      %v2177 = vmul.f32 %v1466, %v2039
      %v2178 = vmul.f32 %v1467, %v2044
      %v2179 = vmul.f32 %v1468, %v2049
      %v2180 = vmul.f32 %v1469, %v2054
      %v2181 = vmul.f32 %v1470, %v2059
      %v2182 = vmul.f32 %v1471, %v2064
      %v2183 = vmul.f32 %v1472, %v2069
      %v2184 = vmul.f32 %v1473, %v2074
      %v2185 = vmul.f32 %v1474, %v2079
      %v2186 = vmul.f32 %v1475, %v2084
      %v2187 = vmul.f32 %v1476, %v2089
      %v2188 = vmul.f32 %v1477, %v2094
      %v2189 = vmul.f32 %v1478, %v2099
      %v2190 = vmul.f32 %v1479, %v2104
      %v2191 = vmul.f32 %v1480, %v2109
      %v2192 = vmul.f32 %v1481, %v2114
      %v2193 = vmul.f32 %v1482, %v2119
      %v2194 = vmul.f32 %v1483, %v2124
      %v2195 = vmul.f32 %v1484, %v2129
      %v2196 = vld [vmem:[%s7] sm:$0xff]
      %v2197 = vld [vmem:[%s7 + $0x8] sm:$0xff]
      %v2198 = vld [vmem:[%s7 + $0x10] sm:$0xff]
      %v2199 = vld [vmem:[%s7 + $0x18] sm:$0xff]
      %v2200 = vld [vmem:[%s7 + $0x20] sm:$0xff]
      %v2201 = vld [vmem:[%s7 + $0x28] sm:$0xff]
      %v2202 = vld [vmem:[%s7 + $0x30] sm:$0xff]
      %v2203 = vld [vmem:[%s7 + $0x38] sm:$0xff]
      %v2204 = vld [vmem:[%s7 + $0x40] sm:$0xff]
      %v2205 = vld [vmem:[%s7 + $0x48] sm:$0xff]
      %v2206 = vld [vmem:[%s7 + $0x50] sm:$0xff]
      %v2207 = vld [vmem:[%s7 + $0x58] sm:$0xff]
      %v2208 = vld [vmem:[%s7 + $0x60] sm:$0xff]
      %v2209 = vld [vmem:[%s7 + $0x68] sm:$0xff]
      %v2210 = vld [vmem:[%s7 + $0x70] sm:$0xff]
      %v2211 = vld [vmem:[%s7 + $0x78] sm:$0xff]
      %2212 = vmatprep.subr.mxu0 0.0
      %2213 = vmatpush1.msra.mxu0 %v2211
      %2214 = vmatprep.subr.mxu0 0.0
      %2215 = vmatpush1.msra.mxu0 %v2210
      %2216 = vmatprep.subr.mxu0 0.0
      %2217 = vmatpush1.msra.mxu0 %v2209
      %2218 = vmatprep.subr.mxu0 0.0
      %2219 = vmatpush1.msra.mxu0 %v2208
      %2220 = vmatprep.subr.mxu0 0.0
      %2221 = vmatpush1.msra.mxu0 %v2207
      %2222 = vmatprep.subr.mxu0 0.0
      %2223 = vmatpush1.msra.mxu0 %v2206
      %2224 = vmatprep.subr.mxu0 0.0
      %2225 = vmatpush1.msra.mxu0 %v2205
      %2226 = vmatprep.subr.mxu0 0.0
      %2227 = vmatpush1.msra.mxu0 %v2204
      %2228 = vmatprep.subr.mxu0 0.0
      %2229 = vmatpush1.msra.mxu0 %v2203
      %2230 = vmatprep.subr.mxu0 0.0
      %2231 = vmatpush1.msra.mxu0 %v2202
      %2232 = vmatprep.subr.mxu0 0.0
      %2233 = vmatpush1.msra.mxu0 %v2201
      %2234 = vmatprep.subr.mxu0 0.0
      %2235 = vmatpush1.msra.mxu0 %v2200
      %2236 = vmatprep.subr.mxu0 0.0
      %2237 = vmatpush1.msra.mxu0 %v2199
      %2238 = vmatprep.subr.mxu0 0.0
      %2239 = vmatpush1.msra.mxu0 %v2198
      %2240 = vmatprep.subr.mxu0 0.0
      %2241 = vmatpush1.msra.mxu0 %v2197
      %2242 = vmatprep.subr.mxu0 0.0
      %2243 = vmatpush1.msra.mxu0 %v2196
      %2244 = vmatprep.subr.mxu0 0.0
      %2245 = vmatpush2.msra.mxu0 0.0
      %2246 = vmatprep.subr.mxu0 0.0
      %2247 = vmatpush2.msra.mxu0 0.0
      %2248 = vmatprep.subr.mxu0 0.0
      %2249 = vmatpush2.msra.mxu0 0.0
      %2250 = vmatprep.subr.mxu0 0.0
      %2251 = vmatpush2.msra.mxu0 0.0
      %2252 = vmatprep.subr.mxu0 0.0
      %2253 = vmatpush2.msra.mxu0 0.0
      %2254 = vmatprep.subr.mxu0 0.0
      %2255 = vmatpush2.msra.mxu0 0.0
      %2256 = vmatprep.subr.mxu0 0.0
      %2257 = vmatpush2.msra.mxu0 0.0
      %2258 = vmatprep.subr.mxu0 0.0
      %2259 = vmatpush2.msra.mxu0 0.0
      %2260 = vmatprep.subr.mxu0 0.0
      %2261 = vmatpush2.msra.mxu0 0.0
      %2262 = vmatprep.subr.mxu0 0.0
      %2263 = vmatpush2.msra.mxu0 0.0
      %2264 = vmatprep.subr.mxu0 0.0
      %2265 = vmatpush2.msra.mxu0 0.0
      %2266 = vmatprep.subr.mxu0 0.0
      %2267 = vmatpush2.msra.mxu0 0.0
      %2268 = vmatprep.subr.mxu0 0.0
      %2269 = vmatpush2.msra.mxu0 0.0
      %2270 = vmatprep.subr.mxu0 0.0
      %2271 = vmatpush2.msra.mxu0 0.0
      %2272 = vmatprep.subr.mxu0 0.0
      %2273 = vmatpush2.msra.mxu0 0.0
      %2274 = vmatprep.subr.mxu0 0.0
      %2275 = vmatpush2.msra.mxu0 0.0
      %2276 = vmatprep.mubr.f32.mxu0 0.0
      %2277 = vmatmul.mubr.f32.gmra.mxu0 %v2132
      %v2278 = vpop.f32.mrf.mxu0
      %v2279 = vadd.f32 0.0, %v2278
      %v2280 = vpop.f32.mrf.mxu0
      %2281 = vmatprep.mubr.f32.mxu0 0.0
      %2282 = vmatmul.mubr.f32.gmra.mxu0 %v2133
      %v2283 = vpop.f32.mrf.mxu0
      %v2284 = vadd.f32 0.0, %v2283
      %v2285 = vpop.f32.mrf.mxu0
      %2286 = vmatprep.mubr.f32.mxu0 0.0
      %2287 = vmatmul.mubr.f32.gmra.mxu0 %v2134
      %v2288 = vpop.f32.mrf.mxu0
      %v2289 = vadd.f32 0.0, %v2288
      %v2290 = vpop.f32.mrf.mxu0
      %2291 = vmatprep.mubr.f32.mxu0 0.0
      %2292 = vmatmul.mubr.f32.gmra.mxu0 %v2135
      %v2293 = vpop.f32.mrf.mxu0
      %v2294 = vadd.f32 0.0, %v2293
      %v2295 = vpop.f32.mrf.mxu0
      %2296 = vmatprep.mubr.f32.mxu0 0.0
      %2297 = vmatmul.mubr.f32.gmra.mxu0 %v2136
      %v2298 = vpop.f32.mrf.mxu0
      %v2299 = vadd.f32 0.0, %v2298
      %v2300 = vpop.f32.mrf.mxu0
      %2301 = vmatprep.mubr.f32.mxu0 0.0
      %2302 = vmatmul.mubr.f32.gmra.mxu0 %v2137
      %v2303 = vpop.f32.mrf.mxu0
      %v2304 = vadd.f32 0.0, %v2303
      %v2305 = vpop.f32.mrf.mxu0
      %2306 = vmatprep.mubr.f32.mxu0 0.0
      %2307 = vmatmul.mubr.f32.gmra.mxu0 %v2138
      %v2308 = vpop.f32.mrf.mxu0
      %v2309 = vadd.f32 0.0, %v2308
      %v2310 = vpop.f32.mrf.mxu0
      %2311 = vmatprep.mubr.f32.mxu0 0.0
      %2312 = vmatmul.mubr.f32.gmra.mxu0 %v2139
      %v2313 = vpop.f32.mrf.mxu0
      %v2314 = vadd.f32 0.0, %v2313
      %v2315 = vpop.f32.mrf.mxu0
      %2316 = vmatprep.mubr.f32.mxu0 0.0
      %2317 = vmatmul.mubr.f32.gmra.mxu0 %v2140
      %v2318 = vpop.f32.mrf.mxu0
      %v2319 = vadd.f32 0.0, %v2318
      %v2320 = vpop.f32.mrf.mxu0
      %2321 = vmatprep.mubr.f32.mxu0 0.0
      %2322 = vmatmul.mubr.f32.gmra.mxu0 %v2141
      %v2323 = vpop.f32.mrf.mxu0
      %v2324 = vadd.f32 0.0, %v2323
      %v2325 = vpop.f32.mrf.mxu0
      %2326 = vmatprep.mubr.f32.mxu0 0.0
      %2327 = vmatmul.mubr.f32.gmra.mxu0 %v2142
      %v2328 = vpop.f32.mrf.mxu0
      %v2329 = vadd.f32 0.0, %v2328
      %v2330 = vpop.f32.mrf.mxu0
      %2331 = vmatprep.mubr.f32.mxu0 0.0
      %2332 = vmatmul.mubr.f32.gmra.mxu0 %v2143
      %v2333 = vpop.f32.mrf.mxu0
      %v2334 = vadd.f32 0.0, %v2333
      %v2335 = vpop.f32.mrf.mxu0
      %2336 = vmatprep.mubr.f32.mxu0 0.0
      %2337 = vmatmul.mubr.f32.gmra.mxu0 %v2144
      %v2338 = vpop.f32.mrf.mxu0
      %v2339 = vadd.f32 0.0, %v2338
      %v2340 = vpop.f32.mrf.mxu0
      %2341 = vmatprep.mubr.f32.mxu0 0.0
      %2342 = vmatmul.mubr.f32.gmra.mxu0 %v2145
      %v2343 = vpop.f32.mrf.mxu0
      %v2344 = vadd.f32 0.0, %v2343
      %v2345 = vpop.f32.mrf.mxu0
      %2346 = vmatprep.mubr.f32.mxu0 0.0
      %2347 = vmatmul.mubr.f32.gmra.mxu0 %v2146
      %v2348 = vpop.f32.mrf.mxu0
      %v2349 = vadd.f32 0.0, %v2348
      %v2350 = vpop.f32.mrf.mxu0
      %2351 = vmatprep.mubr.f32.mxu0 0.0
      %2352 = vmatmul.mubr.f32.gmra.mxu0 %v2147
      %v2353 = vpop.f32.mrf.mxu0
      %v2354 = vadd.f32 0.0, %v2353
      %v2355 = vpop.f32.mrf.mxu0
      %2356 = vmatprep.mubr.f32.mxu0 0.0
      %2357 = vmatmul.mubr.f32.gmra.mxu0 %v2148
      %v2358 = vpop.f32.mrf.mxu0
      %v2359 = vadd.f32 0.0, %v2358
      %v2360 = vpop.f32.mrf.mxu0
      %2361 = vmatprep.mubr.f32.mxu0 0.0
      %2362 = vmatmul.mubr.f32.gmra.mxu0 %v2149
      %v2363 = vpop.f32.mrf.mxu0
      %v2364 = vadd.f32 0.0, %v2363
      %v2365 = vpop.f32.mrf.mxu0
      %2366 = vmatprep.mubr.f32.mxu0 0.0
      %2367 = vmatmul.mubr.f32.gmra.mxu0 %v2150
      %v2368 = vpop.f32.mrf.mxu0
      %v2369 = vadd.f32 0.0, %v2368
      %v2370 = vpop.f32.mrf.mxu0
      %2371 = vmatprep.mubr.f32.mxu0 0.0
      %2372 = vmatmul.mubr.f32.gmra.mxu0 %v2151
      %v2373 = vpop.f32.mrf.mxu0
      %v2374 = vadd.f32 0.0, %v2373
      %v2375 = vpop.f32.mrf.mxu0
      %2376 = vmatprep.mubr.f32.mxu0 0.0
      %2377 = vmatmul.mubr.f32.gmra.mxu0 %v2152
      %v2378 = vpop.f32.mrf.mxu0
      %v2379 = vadd.f32 0.0, %v2378
      %v2380 = vpop.f32.mrf.mxu0
      %2381 = vmatprep.mubr.f32.mxu0 0.0
      %2382 = vmatmul.mubr.f32.gmra.mxu0 %v2153
      %v2383 = vpop.f32.mrf.mxu0
      %v2384 = vadd.f32 0.0, %v2383
      %v2385 = vpop.f32.mrf.mxu0
      %2386 = vmatprep.mubr.f32.mxu0 0.0
      %2387 = vmatmul.mubr.f32.gmra.mxu0 %v2154
      %v2388 = vpop.f32.mrf.mxu0
      %v2389 = vadd.f32 0.0, %v2388
      %v2390 = vpop.f32.mrf.mxu0
      %2391 = vmatprep.mubr.f32.mxu0 0.0
      %2392 = vmatmul.mubr.f32.gmra.mxu0 %v2155
      %v2393 = vpop.f32.mrf.mxu0
      %v2394 = vadd.f32 0.0, %v2393
      %v2395 = vpop.f32.mrf.mxu0
      %2396 = vmatprep.mubr.f32.mxu0 0.0
      %2397 = vmatmul.mubr.f32.gmra.mxu0 %v2156
      %v2398 = vpop.f32.mrf.mxu0
      %v2399 = vadd.f32 0.0, %v2398
      %v2400 = vpop.f32.mrf.mxu0
      %2401 = vmatprep.mubr.f32.mxu0 0.0
      %2402 = vmatmul.mubr.f32.gmra.mxu0 %v2157
      %v2403 = vpop.f32.mrf.mxu0
      %v2404 = vadd.f32 0.0, %v2403
      %v2405 = vpop.f32.mrf.mxu0
      %2406 = vmatprep.mubr.f32.mxu0 0.0
      %2407 = vmatmul.mubr.f32.gmra.mxu0 %v2158
      %v2408 = vpop.f32.mrf.mxu0
      %v2409 = vadd.f32 0.0, %v2408
      %v2410 = vpop.f32.mrf.mxu0
      %2411 = vmatprep.mubr.f32.mxu0 0.0
      %2412 = vmatmul.mubr.f32.gmra.mxu0 %v2159
      %v2413 = vpop.f32.mrf.mxu0
      %v2414 = vadd.f32 0.0, %v2413
      %v2415 = vpop.f32.mrf.mxu0
      %2416 = vmatprep.mubr.f32.mxu0 0.0
      %2417 = vmatmul.mubr.f32.gmra.mxu0 %v2160
      %v2418 = vpop.f32.mrf.mxu0
      %v2419 = vadd.f32 0.0, %v2418
      %v2420 = vpop.f32.mrf.mxu0
      %2421 = vmatprep.mubr.f32.mxu0 0.0
      %2422 = vmatmul.mubr.f32.gmra.mxu0 %v2161
      %v2423 = vpop.f32.mrf.mxu0
      %v2424 = vadd.f32 0.0, %v2423
      %v2425 = vpop.f32.mrf.mxu0
      %2426 = vmatprep.mubr.f32.mxu0 0.0
      %2427 = vmatmul.mubr.f32.gmra.mxu0 %v2162
      %v2428 = vpop.f32.mrf.mxu0
      %v2429 = vadd.f32 0.0, %v2428
      %v2430 = vpop.f32.mrf.mxu0
      %2431 = vmatprep.mubr.f32.mxu0 0.0
      %2432 = vmatmul.mubr.f32.gmra.mxu0 %v2163
      %v2433 = vpop.f32.mrf.mxu0
      %v2434 = vadd.f32 0.0, %v2433
      %v2435 = vpop.f32.mrf.mxu0
      %2436 = vmatprep.mubr.f32.mxu0 0.0
      %2437 = vmatmul.mubr.f32.gmra.mxu0 %v2164
      %v2438 = vpop.f32.mrf.mxu0
      %v2439 = vadd.f32 0.0, %v2438
      %v2440 = vpop.f32.mrf.mxu0
      %2441 = vmatprep.mubr.f32.mxu0 0.0
      %2442 = vmatmul.mubr.f32.gmra.mxu0 %v2165
      %v2443 = vpop.f32.mrf.mxu0
      %v2444 = vadd.f32 0.0, %v2443
      %v2445 = vpop.f32.mrf.mxu0
      %2446 = vmatprep.mubr.f32.mxu0 0.0
      %2447 = vmatmul.mubr.f32.gmra.mxu0 %v2166
      %v2448 = vpop.f32.mrf.mxu0
      %v2449 = vadd.f32 0.0, %v2448
      %v2450 = vpop.f32.mrf.mxu0
      %2451 = vmatprep.mubr.f32.mxu0 0.0
      %2452 = vmatmul.mubr.f32.gmra.mxu0 %v2167
      %v2453 = vpop.f32.mrf.mxu0
      %v2454 = vadd.f32 0.0, %v2453
      %v2455 = vpop.f32.mrf.mxu0
      %2456 = vmatprep.mubr.f32.mxu0 0.0
      %2457 = vmatmul.mubr.f32.gmra.mxu0 %v2168
      %v2458 = vpop.f32.mrf.mxu0
      %v2459 = vadd.f32 0.0, %v2458
      %v2460 = vpop.f32.mrf.mxu0
      %2461 = vmatprep.mubr.f32.mxu0 0.0
      %2462 = vmatmul.mubr.f32.gmra.mxu0 %v2169
      %v2463 = vpop.f32.mrf.mxu0
      %v2464 = vadd.f32 0.0, %v2463
      %v2465 = vpop.f32.mrf.mxu0
      %2466 = vmatprep.mubr.f32.mxu0 0.0
      %2467 = vmatmul.mubr.f32.gmra.mxu0 %v2170
      %v2468 = vpop.f32.mrf.mxu0
      %v2469 = vadd.f32 0.0, %v2468
      %v2470 = vpop.f32.mrf.mxu0
      %2471 = vmatprep.mubr.f32.mxu0 0.0
      %2472 = vmatmul.mubr.f32.gmra.mxu0 %v2171
      %v2473 = vpop.f32.mrf.mxu0
      %v2474 = vadd.f32 0.0, %v2473
      %v2475 = vpop.f32.mrf.mxu0
      %2476 = vmatprep.mubr.f32.mxu0 0.0
      %2477 = vmatmul.mubr.f32.gmra.mxu0 %v2172
      %v2478 = vpop.f32.mrf.mxu0
      %v2479 = vadd.f32 0.0, %v2478
      %v2480 = vpop.f32.mrf.mxu0
      %2481 = vmatprep.mubr.f32.mxu0 0.0
      %2482 = vmatmul.mubr.f32.gmra.mxu0 %v2173
      %v2483 = vpop.f32.mrf.mxu0
      %v2484 = vadd.f32 0.0, %v2483
      %v2485 = vpop.f32.mrf.mxu0
      %2486 = vmatprep.mubr.f32.mxu0 0.0
      %2487 = vmatmul.mubr.f32.gmra.mxu0 %v2174
      %v2488 = vpop.f32.mrf.mxu0
      %v2489 = vadd.f32 0.0, %v2488
      %v2490 = vpop.f32.mrf.mxu0
      %2491 = vmatprep.mubr.f32.mxu0 0.0
      %2492 = vmatmul.mubr.f32.gmra.mxu0 %v2175
      %v2493 = vpop.f32.mrf.mxu0
      %v2494 = vadd.f32 0.0, %v2493
      %v2495 = vpop.f32.mrf.mxu0
      %2496 = vmatprep.mubr.f32.mxu0 0.0
      %2497 = vmatmul.mubr.f32.gmra.mxu0 %v2176
      %v2498 = vpop.f32.mrf.mxu0
      %v2499 = vadd.f32 0.0, %v2498
      %v2500 = vpop.f32.mrf.mxu0
      %2501 = vmatprep.mubr.f32.mxu0 0.0
      %2502 = vmatmul.mubr.f32.gmra.mxu0 %v2177
      %v2503 = vpop.f32.mrf.mxu0
      %v2504 = vadd.f32 0.0, %v2503
      %v2505 = vpop.f32.mrf.mxu0
      %2506 = vmatprep.mubr.f32.mxu0 0.0
      %2507 = vmatmul.mubr.f32.gmra.mxu0 %v2178
      %v2508 = vpop.f32.mrf.mxu0
      %v2509 = vadd.f32 0.0, %v2508
      %v2510 = vpop.f32.mrf.mxu0
      %2511 = vmatprep.mubr.f32.mxu0 0.0
      %2512 = vmatmul.mubr.f32.gmra.mxu0 %v2179
      %v2513 = vpop.f32.mrf.mxu0
      %v2514 = vadd.f32 0.0, %v2513
      %v2515 = vpop.f32.mrf.mxu0
      %2516 = vmatprep.mubr.f32.mxu0 0.0
      %2517 = vmatmul.mubr.f32.gmra.mxu0 %v2180
      %v2518 = vpop.f32.mrf.mxu0
      %v2519 = vadd.f32 0.0, %v2518
      %v2520 = vpop.f32.mrf.mxu0
      %2521 = vmatprep.mubr.f32.mxu0 0.0
      %2522 = vmatmul.mubr.f32.gmra.mxu0 %v2181
      %v2523 = vpop.f32.mrf.mxu0
      %v2524 = vadd.f32 0.0, %v2523
      %v2525 = vpop.f32.mrf.mxu0
      %2526 = vmatprep.mubr.f32.mxu0 0.0
      %2527 = vmatmul.mubr.f32.gmra.mxu0 %v2182
      %v2528 = vpop.f32.mrf.mxu0
      %v2529 = vadd.f32 0.0, %v2528
      %v2530 = vpop.f32.mrf.mxu0
      %2531 = vmatprep.mubr.f32.mxu0 0.0
      %2532 = vmatmul.mubr.f32.gmra.mxu0 %v2183
      %v2533 = vpop.f32.mrf.mxu0
      %v2534 = vadd.f32 0.0, %v2533
      %v2535 = vpop.f32.mrf.mxu0
      %2536 = vmatprep.mubr.f32.mxu0 0.0
      %2537 = vmatmul.mubr.f32.gmra.mxu0 %v2184
      %v2538 = vpop.f32.mrf.mxu0
      %v2539 = vadd.f32 0.0, %v2538
      %v2540 = vpop.f32.mrf.mxu0
      %2541 = vmatprep.mubr.f32.mxu0 0.0
      %2542 = vmatmul.mubr.f32.gmra.mxu0 %v2185
      %v2543 = vpop.f32.mrf.mxu0
      %v2544 = vadd.f32 0.0, %v2543
      %v2545 = vpop.f32.mrf.mxu0
      %2546 = vmatprep.mubr.f32.mxu0 0.0
      %2547 = vmatmul.mubr.f32.gmra.mxu0 %v2186
      %v2548 = vpop.f32.mrf.mxu0
      %v2549 = vadd.f32 0.0, %v2548
      %v2550 = vpop.f32.mrf.mxu0
      %2551 = vmatprep.mubr.f32.mxu0 0.0
      %2552 = vmatmul.mubr.f32.gmra.mxu0 %v2187
      %v2553 = vpop.f32.mrf.mxu0
      %v2554 = vadd.f32 0.0, %v2553
      %v2555 = vpop.f32.mrf.mxu0
      %2556 = vmatprep.mubr.f32.mxu0 0.0
      %2557 = vmatmul.mubr.f32.gmra.mxu0 %v2188
      %v2558 = vpop.f32.mrf.mxu0
      %v2559 = vadd.f32 0.0, %v2558
      %v2560 = vpop.f32.mrf.mxu0
      %2561 = vmatprep.mubr.f32.mxu0 0.0
      %2562 = vmatmul.mubr.f32.gmra.mxu0 %v2189
      %v2563 = vpop.f32.mrf.mxu0
      %v2564 = vadd.f32 0.0, %v2563
      %v2565 = vpop.f32.mrf.mxu0
      %2566 = vmatprep.mubr.f32.mxu0 0.0
      %2567 = vmatmul.mubr.f32.gmra.mxu0 %v2190
      %v2568 = vpop.f32.mrf.mxu0
      %v2569 = vadd.f32 0.0, %v2568
      %v2570 = vpop.f32.mrf.mxu0
      %2571 = vmatprep.mubr.f32.mxu0 0.0
      %2572 = vmatmul.mubr.f32.gmra.mxu0 %v2191
      %v2573 = vpop.f32.mrf.mxu0
      %v2574 = vadd.f32 0.0, %v2573
      %v2575 = vpop.f32.mrf.mxu0
      %2576 = vmatprep.mubr.f32.mxu0 0.0
      %2577 = vmatmul.mubr.f32.gmra.mxu0 %v2192
      %v2578 = vpop.f32.mrf.mxu0
      %v2579 = vadd.f32 0.0, %v2578
      %v2580 = vpop.f32.mrf.mxu0
      %2581 = vmatprep.mubr.f32.mxu0 0.0
      %2582 = vmatmul.mubr.f32.gmra.mxu0 %v2193
      %v2583 = vpop.f32.mrf.mxu0
      %v2584 = vadd.f32 0.0, %v2583
      %v2585 = vpop.f32.mrf.mxu0
      %2586 = vmatprep.mubr.f32.mxu0 0.0
      %2587 = vmatmul.mubr.f32.gmra.mxu0 %v2194
      %v2588 = vpop.f32.mrf.mxu0
      %v2589 = vadd.f32 0.0, %v2588
      %v2590 = vpop.f32.mrf.mxu0
      %2591 = vmatprep.mubr.f32.mxu0 0.0
      %2592 = vmatmul.mubr.f32.gmra.mxu0 %v2195
      %v2593 = vpop.f32.mrf.mxu0
      %v2594 = vadd.f32 0.0, %v2593
      %v2595 = vpop.f32.mrf.mxu0
      %2596 = vdwg.mxu0
      %2597 = vst.msk [vmem:[%s329] sm:$0xff] %vm579, %v2279
      %2598 = vst.msk [vmem:[%s329 + $0x8] sm:$0xff] %vm579, %v2284
      %2599 = vst.msk [vmem:[%s329 + $0x10] sm:$0xff] %vm579, %v2289
      %2600 = vst.msk [vmem:[%s329 + $0x18] sm:$0xff] %vm579, %v2294
      %2601 = vst.msk [vmem:[%s329 + $0x20] sm:$0xff] %vm579, %v2299
      %2602 = vst.msk [vmem:[%s329 + $0x28] sm:$0xff] %vm579, %v2304
      %2603 = vst.msk [vmem:[%s329 + $0x30] sm:$0xff] %vm579, %v2309
      %2604 = vst.msk [vmem:[%s329 + $0x38] sm:$0xff] %vm579, %v2314
      %2605 = vst.msk [vmem:[%s329 + $0x40] sm:$0xff] %vm579, %v2319
      %2606 = vst.msk [vmem:[%s329 + $0x48] sm:$0xff] %vm579, %v2324
      %2607 = vst.msk [vmem:[%s329 + $0x50] sm:$0xff] %vm579, %v2329
      %2608 = vst.msk [vmem:[%s329 + $0x58] sm:$0xff] %vm579, %v2334
      %2609 = vst.msk [vmem:[%s329 + $0x60] sm:$0xff] %vm579, %v2339
      %2610 = vst.msk [vmem:[%s329 + $0x68] sm:$0xff] %vm579, %v2344
      %2611 = vst.msk [vmem:[%s329 + $0x70] sm:$0xff] %vm579, %v2349
      %2612 = vst.msk [vmem:[%s329 + $0x78] sm:$0xff] %vm579, %v2354
      %2613 = vst.msk [vmem:[%s329 + $0x80] sm:$0xff] %vm579, %v2359
      %2614 = vst.msk [vmem:[%s329 + $0x88] sm:$0xff] %vm579, %v2364
      %2615 = vst.msk [vmem:[%s329 + $0x90] sm:$0xff] %vm579, %v2369
      %2616 = vst.msk [vmem:[%s329 + $0x98] sm:$0xff] %vm579, %v2374
      %2617 = vst.msk [vmem:[%s329 + $0xa0] sm:$0xff] %vm579, %v2379
      %2618 = vst.msk [vmem:[%s329 + $0xa8] sm:$0xff] %vm579, %v2384
      %2619 = vst.msk [vmem:[%s329 + $0xb0] sm:$0xff] %vm579, %v2389
      %2620 = vst.msk [vmem:[%s329 + $0xb8] sm:$0xff] %vm579, %v2394
      %2621 = vst.msk [vmem:[%s329 + $0xc0] sm:$0xff] %vm579, %v2399
      %2622 = vst.msk [vmem:[%s329 + $0xc8] sm:$0xff] %vm579, %v2404
      %2623 = vst.msk [vmem:[%s329 + $0xd0] sm:$0xff] %vm579, %v2409
      %2624 = vst.msk [vmem:[%s329 + $0xd8] sm:$0xff] %vm579, %v2414
      %2625 = vst.msk [vmem:[%s329 + $0xe0] sm:$0xff] %vm579, %v2419
      %2626 = vst.msk [vmem:[%s329 + $0xe8] sm:$0xff] %vm579, %v2424
      %2627 = vst.msk [vmem:[%s329 + $0xf0] sm:$0xff] %vm579, %v2429
      %2628 = vst.msk [vmem:[%s329 + $0xf8] sm:$0xff] %vm579, %v2434
      %2629 = vst.msk [vmem:[%s329 + $0x100] sm:$0xff] %vm579, %v2439
      %2630 = vst.msk [vmem:[%s329 + $0x108] sm:$0xff] %vm579, %v2444
      %2631 = vst.msk [vmem:[%s329 + $0x110] sm:$0xff] %vm579, %v2449
      %2632 = vst.msk [vmem:[%s329 + $0x118] sm:$0xff] %vm579, %v2454
      %2633 = vst.msk [vmem:[%s329 + $0x120] sm:$0xff] %vm579, %v2459
      %2634 = vst.msk [vmem:[%s329 + $0x128] sm:$0xff] %vm579, %v2464
      %2635 = vst.msk [vmem:[%s329 + $0x130] sm:$0xff] %vm579, %v2469
      %2636 = vst.msk [vmem:[%s329 + $0x138] sm:$0xff] %vm579, %v2474
      %2637 = vst.msk [vmem:[%s329 + $0x140] sm:$0xff] %vm579, %v2479
      %2638 = vst.msk [vmem:[%s329 + $0x148] sm:$0xff] %vm579, %v2484
      %2639 = vst.msk [vmem:[%s329 + $0x150] sm:$0xff] %vm579, %v2489
      %2640 = vst.msk [vmem:[%s329 + $0x158] sm:$0xff] %vm579, %v2494
      %2641 = vst.msk [vmem:[%s329 + $0x160] sm:$0xff] %vm579, %v2499
      %2642 = vst.msk [vmem:[%s329 + $0x168] sm:$0xff] %vm579, %v2504
      %2643 = vst.msk [vmem:[%s329 + $0x170] sm:$0xff] %vm579, %v2509
      %2644 = vst.msk [vmem:[%s329 + $0x178] sm:$0xff] %vm579, %v2514
      %2645 = vst.msk [vmem:[%s329 + $0x180] sm:$0xff] %vm579, %v2519
      %2646 = vst.msk [vmem:[%s329 + $0x188] sm:$0xff] %vm579, %v2524
      %2647 = vst.msk [vmem:[%s329 + $0x190] sm:$0xff] %vm579, %v2529
      %2648 = vst.msk [vmem:[%s329 + $0x198] sm:$0xff] %vm579, %v2534
      %2649 = vst.msk [vmem:[%s329 + $0x1a0] sm:$0xff] %vm579, %v2539
      %2650 = vst.msk [vmem:[%s329 + $0x1a8] sm:$0xff] %vm579, %v2544
      %2651 = vst.msk [vmem:[%s329 + $0x1b0] sm:$0xff] %vm579, %v2549
      %2652 = vst.msk [vmem:[%s329 + $0x1b8] sm:$0xff] %vm579, %v2554
      %2653 = vst.msk [vmem:[%s329 + $0x1c0] sm:$0xff] %vm579, %v2559
      %2654 = vst.msk [vmem:[%s329 + $0x1c8] sm:$0xff] %vm579, %v2564
      %2655 = vst.msk [vmem:[%s329 + $0x1d0] sm:$0xff] %vm579, %v2569
      %2656 = vst.msk [vmem:[%s329 + $0x1d8] sm:$0xff] %vm579, %v2574
      %2657 = vst.msk [vmem:[%s329 + $0x1e0] sm:$0xff] %vm579, %v2579
      %2658 = vst.msk [vmem:[%s329 + $0x1e8] sm:$0xff] %vm579, %v2584
      %2659 = vst.msk [vmem:[%s329 + $0x1f0] sm:$0xff] %vm579, %v2589
      %2660 = vst.msk [vmem:[%s329 + $0x1f8] sm:$0xff] %vm579, %v2594
      %s2661 = smul.u32 64, %s19
      %p2662 = scmp.lt.s32.totalorder %s2661, 127
      %s2663 = scalar_select %p2662, %s2661, 127
      %s2664 = smul.addr %s2663, 8
      %s2665 = scalar_lea.vmem %s8, %s2664
      // Predicated region
      $region53: #{_lambda_.1} parent=51 // pred_check
        %p2666 = pneg %p215
      $region54: #{_lambda_.1} parent=51 // pred_check_branch
        %2668 = sbr.rel (%p2666) target = $region56
      $region55: #{_lambda_.1} parent=51 // pred_region
        %s2669 = smul.u32 64, %s19
      $region56: #{_lambda_.1} parent=51 // pred_fallthru
        _
    $region52: #{_lambda_.1} parent=5 // pred_fallthru
      _
    %p2670 = scmp.le.s32.totalorder 2, %s14
    // Predicated region
    $region57: #{_lambda_.1} parent=5 // pred_check
      %p2671 = pneg %p2670
    $region58: #{_lambda_.1} parent=5 // pred_check_branch
      %2673 = sbr.rel (%p2671) target = $region60
    $region59: #{_lambda_.1} parent=5 // pred_region
      %s2674 = ssub.s32 %s14, 2
      // Predicated region
      $region61: #{_lambda_.1} parent=59 // pred_check
        %p2675 = pneg %p221
      $region62: #{_lambda_.1} parent=59 // pred_check_branch
        %2677 = sbr.rel (%p2675) target = $region64
      $region63: #{_lambda_.1} parent=59 // pred_region
        %s2678 = smul.u32 64, %s20
        %p2679 = scmp.lt.s32.totalorder %s2678, 127
        %s2680 = scalar_select %p2679, %s2678, 127
        %s2681 = smul.addr %s2680, 8
        %s2682 = scalar_lea.vmem %s8, %s2681
      $region64: #{_lambda_.1} parent=59 // pred_fallthru
        _
    $region60: #{_lambda_.1} parent=5 // pred_fallthru
      _
  $region6: #{_lambda_.1} parent=0 // loop_footer
    %s18 = sadd.s32 1, %s14
  $region7: #{_lambda_.1} parent=0 // loop_footer_branch
    %13 = sbr.rel target = $region3
  $region8: #{_lambda_.1} parent=0 // loop_exit
    _

</llo_original>
